<compile_context>
chip_gen: v7x
topology: tpu7x:2x2x1
jax: 0.10.0
libtpu: 0.0.40
codegen_flags: <defaults>
</compile_context>

<pallas_src>
import jax
import jax.numpy as jnp
from jax.experimental import pallas as pl
from jax.experimental.pallas import tpu as pltpu

_LANE = 128


def _basic_block_kernel(
    # --- scalar prefetch (SMEM) ---------------------------------------------
    out_tile_ref,   # (num_chunks,) i32 : destination tile of each chunk (index_map only)
    first_ref,      # (num_chunks,) i32 : 1 -> first chunk of its tile (reset acc)
    last_ref,       # (num_chunks,) i32 : 1 -> last chunk of its tile (emit output)
    valid_ref,      # (num_chunks,) i32 : 1 -> chunk holds at least one real edge
    bnd_ref,        # (num_chunks*(TM+1),) i32 : per-chunk local-row edge boundaries
    # --- VMEM inputs ----------------------------------------------------------
    x_ref,          # (din_p, TE)  edge features, destination-grouped, lane-dense
    w1t_ref,        # (Hp, din_p)  in_linear weight, transposed
    b1t_ref,        # (Hp, 1) f32
    w2t_ref,        # (Dp, Hp)     out_linear weight, transposed
    b2t_ref,        # (Dp, 1) f32
    # --- VMEM output / scratch ------------------------------------------------
    out_ref,        # (1, Dp, TM) f32 : per-tile output block (host un-transposes)
    acc_ref,        # (Hp, TM) f32 scratch : running segment max of current tile
):
    del out_tile_ref  # consumed by the output index_map only
    c = pl.program_id(0)
    tm = acc_ref.shape[1]
    te = x_ref.shape[1]

    # New destination tile -> reset the running max.  Zero init mirrors the
    # PyTorch scatter_max into a zero-initialised buffer.
    @pl.when(first_ref[c] == 1)
    def _():
        acc_ref[...] = jnp.zeros_like(acc_ref)

    # Skip all compute on dummy chunks / chunks of empty tiles.
    @pl.when(valid_ref[c] == 1)
    def _():
        # in_linear (transposed orientation): ht = relu(W1^T x + b1), (Hp, TE).
        # Plain (M,K)x(K,N) contraction, f32 MXU accumulation, f32 elementwise.
        ht = jnp.dot(w1t_ref[...], x_ref[...],
                     preferred_element_type=jnp.float32)
        ht = jnp.maximum(ht + b1t_ref[...], 0.0)            # ht >= 0

        # Segment max: edges of local row m occupy the contiguous lane range
        # [bnd[c,m], bnd[c,m+1]) of this chunk (destination-sorted layout), so
        # each row is one range mask + lane-max reduce.  Zero fill is exact
        # because ht >= 0 and empty groups must end up 0 (PyTorch semantics).
        lane = jax.lax.broadcasted_iota(jnp.int32, (1, te), 1)
        base = c * (tm + 1)
        cols = []
        for m in range(tm):                                  # statically unrolled
            lo = bnd_ref[base + m]
            hi = bnd_ref[base + m + 1]
            sel = jnp.where((lane >= lo) & (lane < hi), ht, 0.0)   # (Hp, TE)
            cols.append(jnp.max(sel, axis=1, keepdims=True))       # (Hp, 1)
        acc_ref[...] = jnp.maximum(acc_ref[...],
                                   jnp.concatenate(cols, axis=1))  # (Hp, TM)

    # Last chunk of this tile: out_linear (Linear + ReLU) into the output block.
    @pl.when(last_ref[c] == 1)
    def _():
        a = acc_ref[...].astype(w2t_ref.dtype)               # (Hp, TM)
        yt = jnp.dot(w2t_ref[...], a,
                     preferred_element_type=jnp.float32)     # (Dp, TM)
        out_ref[0] = jnp.maximum(yt + b2t_ref[...], 0.0)


def basic_block_forward(last_coors, last_features, current_coors, edge, params,
                        *, tile_m=8, tile_e=1024, compute_dtype=jnp.bfloat16):
    """Pallas implementation of BasicBlock.forward.

    last_coors (N,3), last_features (N,f), current_coors (M,3), edge (2,E) int.
    Returns current_features (M, out_channels) float32.
    """
    assert tile_m % 8 == 0
    assert tile_e % _LANE == 0

    cur_idx = edge[0, :].astype(jnp.int32)
    last_idx = edge[1, :].astype(jnp.int32)
    M = current_coors.shape[0]
    E = int(cur_idx.shape[0])

    w1, b1, w2, b2 = params["w1"], params["b1"], params["w2"], params["b2"]
    din = last_features.shape[1] + 3
    H = w1.shape[1]
    dout = w2.shape[1]
    assert w1.shape[0] == din and w2.shape[0] == H

    din_p = max(8, ((din + 7) // 8) * 8)
    hp = ((H + _LANE - 1) // _LANE) * _LANE
    dp = ((dout + _LANE - 1) // _LANE) * _LANE
    n_tiles = pl.cdiv(M, tile_m)
    m_pad = n_tiles * tile_m

    # ---- single gather pass over the edge data, already in destination order ---
    # Coordinate differences are taken in f32 before any bf16 cast.
    # TODO(synk): move this gather into the kernel (manual make_async_copy rows of
    # last_features kept at memory_space=pl.ANY) so edge features cross HBM once.
    order = jnp.argsort(cur_idx)
    s_cur = cur_idx[order]
    s_last = last_idx[order]
    rel = last_coors[s_last] - current_coors[s_cur]
    x_sorted = jnp.concatenate([last_features[s_last], rel], axis=1)   # (E, din)

    # ---- destination-major grouped layout: every tile owns whole chunks --------
    row_counts = jnp.zeros((m_pad,), jnp.int32).at[s_cur].add(1)
    row_start = jnp.concatenate(
        [jnp.zeros((1,), jnp.int32), jnp.cumsum(row_counts, dtype=jnp.int32)])
    tile_bnd = row_start[::tile_m]                       # (n_tiles+1,)
    tile_edge_start = tile_bnd[:-1]
    n_per_tile = tile_bnd[1:] - tile_bnd[:-1]

    cpt = jnp.maximum(1, (n_per_tile + tile_e - 1) // tile_e)   # chunks per tile
    c0 = jnp.concatenate(
        [jnp.zeros((1,), jnp.int32), jnp.cumsum(cpt, dtype=jnp.int32)])
    total_real = c0[-1]

    num_chunks = (E + tile_e - 1) // tile_e + n_tiles    # static upper bound
    e_grp = num_chunks * tile_e

    t_e = s_cur // tile_m
    k_e = jnp.arange(E, dtype=jnp.int32) - tile_edge_start[t_e]
    p_e = c0[t_e] * tile_e + k_e                          # grouped column of each edge

    # grouped, transposed (lane-dense) edge features
    x_pad = jnp.pad(x_sorted, ((0, 0), (0, din_p - din))).astype(compute_dtype)
    x_grp = jnp.zeros((din_p, e_grp), compute_dtype).at[:, p_e].set(x_pad.T)

    # ---- per-chunk scalar metadata (SMEM) ---------------------------------------
    c_ids = jnp.arange(num_chunks, dtype=jnp.int32)
    out_tile = jnp.clip(
        jnp.searchsorted(c0, c_ids, side="right").astype(jnp.int32) - 1,
        0, n_tiles - 1)
    j = c_ids - c0[out_tile]                              # chunk index within its tile
    is_real = c_ids < total_real
    chunk_edges = jnp.clip(n_per_tile[out_tile] - j * tile_e, 0, tile_e)
    first_flag = (is_real & (j == 0)).astype(jnp.int32)
    last_flag = (is_real & (j == cpt[out_tile] - 1)).astype(jnp.int32)
    valid_flag = (is_real & (chunk_edges > 0)).astype(jnp.int32)

    # Local-row boundaries: row m of the chunk's tile owns chunk-local columns
    # [bnd[c,m], bnd[c,m+1]).  Unclipped values are fine (compares handle them),
    # pad columns are never covered.  Flattened to 1-D for compact SMEM layout.
    rows = jnp.arange(tile_m + 1, dtype=jnp.int32)[None, :]
    row_ids = out_tile[:, None] * tile_m + rows           # (num_chunks, tile_m+1)
    bnd = (row_start[row_ids] - tile_edge_start[out_tile][:, None]
           - j[:, None] * tile_e)
    bnd_flat = jnp.where(is_real[:, None], bnd, 0).astype(jnp.int32).reshape(-1)

    # ---- transposed, zero-padded parameters (padded lanes stay exactly 0) -------
    cd = compute_dtype
    w1t = jnp.zeros((hp, din_p), cd).at[:H, :din].set(w1.T.astype(cd))
    b1t = jnp.zeros((hp, 1), jnp.float32).at[:H, 0].set(b1.astype(jnp.float32))
    w2t = jnp.zeros((dp, hp), cd).at[:dout, :H].set(w2.T.astype(cd))
    b2t = jnp.zeros((dp, 1), jnp.float32).at[:dout, 0].set(b2.astype(jnp.float32))

    grid_spec = pltpu.PrefetchScalarGridSpec(
        num_scalar_prefetch=5,
        grid=(num_chunks,),
        in_specs=[
            pl.BlockSpec((din_p, tile_e), lambda c, ot, ff, lf, vf, bd: (0, c)),  # x
            pl.BlockSpec((hp, din_p), lambda c, ot, ff, lf, vf, bd: (0, 0)),      # w1^T
            pl.BlockSpec((hp, 1), lambda c, ot, ff, lf, vf, bd: (0, 0)),          # b1^T
            pl.BlockSpec((dp, hp), lambda c, ot, ff, lf, vf, bd: (0, 0)),         # w2^T
            pl.BlockSpec((dp, 1), lambda c, ot, ff, lf, vf, bd: (0, 0)),          # b2^T
        ],
        out_specs=pl.BlockSpec((1, dp, tile_m),
                               lambda c, ot, ff, lf, vf, bd: (ot[c], 0, 0)),
        scratch_shapes=[pltpu.VMEM((hp, tile_m), jnp.float32)],
    )

    out_t = pl.pallas_call(
        _basic_block_kernel,
        out_shape=jax.ShapeDtypeStruct((n_tiles, dp, tile_m), jnp.float32),
        grid_spec=grid_spec,
        compiler_params=pltpu.CompilerParams(
            # Chunks of one tile accumulate into the same scratch / output block,
            # so the chunk axis must stay serial.
            # TODO(synk): v7x megacore -- add a leading "parallel" axis that keeps
            # every tile's chunks (and its first/last gating) on one TensorCore.
            dimension_semantics=("arbitrary",),
            vmem_limit_bytes=32 * 1024 * 1024,
        ),
    )(out_tile, first_flag, last_flag, valid_flag, bnd_flat,
      x_grp, w1t, b1t, w2t, b2t)

    # (n_tiles, Dp, TM) -> (M, dout): tiny per-tile un-transpose on the host side.
    out = out_t.transpose(0, 2, 1).reshape(m_pad, dp)
    return out[:M, :dout]


def _reference_forward(last_coors, last_features, current_coors, edge, params):
    """Pure-JAX f32 reference mirroring the PyTorch semantics."""
    cur_idx = edge[0, :]
    last_idx = edge[1, :]
    center = current_coors[cur_idx]
    x = jnp.concatenate(
        [last_features[last_idx], last_coors[last_idx] - center], axis=1)
    h = jnp.maximum(x @ params["w1"] + params["b1"], 0.0)
    M = current_coors.shape[0]
    agg = jnp.zeros((M, h.shape[1]), jnp.float32).at[cur_idx].max(h)
    return jnp.maximum(agg @ params["w2"] + params["b2"], 0.0)


if __name__ == "__main__":
    key = jax.random.PRNGKey(0)
    N, M, E, f = 64, 32, 2048, 4
    in_inter_channels = (f + 3, 32)      # in_linear:  Linear(7 -> 32) + ReLU
    out_inter_channels = (32, 16)        # out_linear: Linear(32 -> 16) + ReLU
    assert in_inter_channels[-1] == out_inter_channels[0]

    k = jax.random.split(key, 9)
    last_coors = jax.random.normal(k[0], (N, 3), jnp.float32)
    last_features = jax.random.normal(k[1], (N, f), jnp.float32)
    current_coors = jax.random.normal(k[2], (M, 3), jnp.float32)
    # Keep the last destination tile (rows 24..31) empty to exercise the
    # "no incoming edges" path (scatter_max into a zero buffer -> relu(b2)).
    edge = jnp.stack([
        jax.random.randint(k[3], (E,), 0, M - 8),
        jax.random.randint(k[4], (E,), 0, N),
    ]).astype(jnp.int32)                                   # (2, E)

    din, hid = in_inter_channels
    _, dout = out_inter_channels
    params = {
        "w1": jax.random.normal(k[5], (din, hid), jnp.float32) / jnp.sqrt(din),
        "b1": jax.random.normal(k[6], (hid,), jnp.float32) * 0.01,
        "w2": jax.random.normal(k[7], (hid, dout), jnp.float32) / jnp.sqrt(hid),
        "b2": jax.random.normal(k[8], (dout,), jnp.float32) * 0.01,
    }

    ref = _reference_forward(last_coors, last_features, current_coors, edge, params)

    # f32 path, small tile_e -> several chunks per tile (exercises accumulation,
    # first/last gating and the valid-skip of dummy chunks).  Tight tolerance.
    out_f32 = basic_block_forward(last_coors, last_features, current_coors, edge,
                                  params, tile_e=256, compute_dtype=jnp.float32)
    # bf16 MXU path at the default (large) tile_e.  Loose tolerance vs f32 ref.
    out_bf16 = basic_block_forward(last_coors, last_features, current_coors, edge,
                                   params, compute_dtype=jnp.bfloat16)
    out_f32, out_bf16 = jax.block_until_ready((out_f32, out_bf16))

    assert out_f32.shape == (M, dout) and out_bf16.shape == (M, dout)
    assert jnp.allclose(out_f32, ref, atol=1e-3, rtol=1e-3), \
        float(jnp.max(jnp.abs(out_f32 - ref)))
    assert jnp.allclose(out_bf16, ref, atol=1e-1, rtol=1e-1), \
        float(jnp.max(jnp.abs(out_bf16 - ref)))
    print("KERNEL_OK")
</pallas_src>

<mosaic_0001>
module attributes {stable_mosaic.version = 11 : i64} {
  func.func @_basic_block_kernel(%arg0: i32, %arg1: memref<12xi32, #tpu.memory_space<smem>>, %arg2: memref<12xi32, #tpu.memory_space<smem>>, %arg3: memref<12xi32, #tpu.memory_space<smem>>, %arg4: memref<12xi32, #tpu.memory_space<smem>>, %arg5: memref<108xi32, #tpu.memory_space<smem>>, %arg6: memref<8x256xf32, #tpu.memory_space<vmem>>, %arg7: memref<128x8xf32, #tpu.memory_space<vmem>>, %arg8: memref<128x1xf32, #tpu.memory_space<vmem>>, %arg9: memref<128x128xf32, #tpu.memory_space<vmem>>, %arg10: memref<128x1xf32, #tpu.memory_space<vmem>>, %arg11: memref<1x128x8xf32, #tpu.memory_space<vmem>>, %arg12: memref<128x8xf32, #tpu.memory_space<vmem>>) attributes {dimension_semantics = [#tpu.dimension_semantics<arbitrary>], iteration_bounds = array<i64: 12>, scalar_prefetch = 5 : i64, scratch_operands = 1 : i64, tpu.core_type = #tpu.core_type<tc>, window_params = [{transform_indices = @transform_0, window_bounds = array<i64: 8, 256>}, {pipeline_mode = #tpu.pipeline_mode<synchronous>, transform_indices = @transform_1, window_bounds = array<i64: 128, 8>}, {pipeline_mode = #tpu.pipeline_mode<synchronous>, transform_indices = @transform_2, window_bounds = array<i64: 128, 1>}, {pipeline_mode = #tpu.pipeline_mode<synchronous>, transform_indices = @transform_3, window_bounds = array<i64: 128, 128>}, {pipeline_mode = #tpu.pipeline_mode<synchronous>, transform_indices = @transform_4, window_bounds = array<i64: 128, 1>}, {transform_indices = @transform_5, window_bounds = array<i64: 1, 128, 8>}]} {
    %0 = arith.index_cast %arg0 : i32 to index
    %1 = memref.load %arg2[%0] : memref<12xi32, #tpu.memory_space<smem>>
    %c1_i32 = arith.constant 1 : i32
    %2 = arith.cmpi eq, %1, %c1_i32 : i32
    %3 = arith.extui %2 : i1 to i32
    %c0_i32 = arith.constant 0 : i32
    %4 = arith.cmpi ne, %3, %c0_i32 : i32
    scf.if %4 {
      %cst = arith.constant 0.000000e+00 : f32
      %15 = vector.broadcast %cst : f32 to vector<128x8xf32>
      %c0 = arith.constant 0 : index
      %c0_4 = arith.constant 0 : index
      %16 = vector.load %arg12[%c0, %c0_4] : memref<128x8xf32, #tpu.memory_space<vmem>>, vector<128x8xf32>
      tpu.vector_store %arg12[%c0, %c0_4], %15 {strides = array<i32>} : memref<128x8xf32, #tpu.memory_space<vmem>>, vector<128x8xf32>,
    } else {
    }
    %5 = arith.index_cast %arg0 : i32 to index
    %6 = memref.load %arg4[%5] : memref<12xi32, #tpu.memory_space<smem>>
    %c1_i32_0 = arith.constant 1 : i32
    %7 = arith.cmpi eq, %6, %c1_i32_0 : i32
    %8 = arith.extui %7 : i1 to i32
    %c0_i32_1 = arith.constant 0 : i32
    %9 = arith.cmpi ne, %8, %c0_i32_1 : i32
    scf.if %9 {
      %c0 = arith.constant 0 : index
      %c0_4 = arith.constant 0 : index
      %15 = vector.load %arg7[%c0, %c0_4] : memref<128x8xf32, #tpu.memory_space<vmem>>, vector<128x8xf32>
      %c0_5 = arith.constant 0 : index
      %c0_6 = arith.constant 0 : index
      %16 = vector.load %arg6[%c0_5, %c0_6] : memref<8x256xf32, #tpu.memory_space<vmem>>, vector<8x256xf32>
      %cst = arith.constant dense<0.000000e+00> : vector<128x256xf32>
      %17 = tpu.matmul %15, %16, %cst {dimension_numbers = #tpu.dot_dimension_numbers<[1], [0], [0], [1], [0, 0, 1, 1], [], []>} : vector<128x8xf32>, vector<8x256xf32>, vector<128x256xf32> -> vector<128x256xf32>
      %c0_7 = arith.constant 0 : index
      %c0_8 = arith.constant 0 : index
      %18 = vector.load %arg8[%c0_7, %c0_8] : memref<128x1xf32, #tpu.memory_space<vmem>>, vector<128x1xf32>
      %19 = vector.broadcast %18 : vector<128x1xf32> to vector<128x256xf32>
      %20 = arith.addf %17, %19 : vector<128x256xf32>
      %cst_9 = arith.constant 0.000000e+00 : f32
      %21 = vector.broadcast %cst_9 : f32 to vector<128x256xf32>
      %22 = arith.maximumf %20, %21 : vector<128x256xf32>
      %23 = tpu.iota {dimensions = array<i32: 1>} : vector<1x256xi32>
      %c9_i32 = arith.constant 9 : i32
      %24 = arith.muli %arg0, %c9_i32 : i32
      %c0_i32_10 = arith.constant 0 : i32
      %25 = arith.addi %24, %c0_i32_10 : i32
      %26 = arith.index_cast %25 : i32 to index
      %27 = memref.load %arg5[%26] : memref<108xi32, #tpu.memory_space<smem>>
      %c0_i32_11 = arith.constant 0 : i32
      %28 = arith.addi %24, %c0_i32_11 : i32
      %c1_i32_12 = arith.constant 1 : i32
      %29 = arith.addi %28, %c1_i32_12 : i32
      %30 = arith.index_cast %29 : i32 to index
      %31 = memref.load %arg5[%30] : memref<108xi32, #tpu.memory_space<smem>>
      %32 = vector.broadcast %27 : i32 to vector<1x256xi32>
      %33 = arith.cmpi sge, %23, %32 : vector<1x256xi32>
      %34 = vector.broadcast %31 : i32 to vector<1x256xi32>
      %35 = arith.cmpi slt, %23, %34 : vector<1x256xi32>
      %36 = arith.andi %33, %35 : vector<1x256xi1>
      %cst_13 = arith.constant 0.000000e+00 : f32
      %37 = vector.shape_cast %36 : vector<1x256xi1> to vector<1x256xi1>
      %38 = vector.broadcast %37 : vector<1x256xi1> to vector<128x256xi1>
      %39 = vector.broadcast %cst_13 : f32 to vector<128x256xf32>
      %40 = arith.select %38, %22, %39 : vector<128x256xi1>, vector<128x256xf32>
      %cst_14 = arith.constant dense<0xFF800000> : vector<128xf32>
      %41 = vector.multi_reduction <maximumf>, %40, %cst_14 [1] : vector<128x256xf32> to vector<128xf32>
      %42 = vector.shape_cast %41 : vector<128xf32> to vector<128x1xf32>
      %c1_i32_15 = arith.constant 1 : i32
      %43 = arith.addi %24, %c1_i32_15 : i32
      %44 = arith.index_cast %43 : i32 to index
      %45 = memref.load %arg5[%44] : memref<108xi32, #tpu.memory_space<smem>>
      %c1_i32_16 = arith.constant 1 : i32
      %46 = arith.addi %24, %c1_i32_16 : i32
      %c1_i32_17 = arith.constant 1 : i32
      %47 = arith.addi %46, %c1_i32_17 : i32
      %48 = arith.index_cast %47 : i32 to index
      %49 = memref.load %arg5[%48] : memref<108xi32, #tpu.memory_space<smem>>
      %50 = vector.broadcast %45 : i32 to vector<1x256xi32>
      %51 = arith.cmpi sge, %23, %50 : vector<1x256xi32>
      %52 = vector.broadcast %49 : i32 to vector<1x256xi32>
      %53 = arith.cmpi slt, %23, %52 : vector<1x256xi32>
      %54 = arith.andi %51, %53 : vector<1x256xi1>
      %cst_18 = arith.constant 0.000000e+00 : f32
      %55 = vector.shape_cast %54 : vector<1x256xi1> to vector<1x256xi1>
      %56 = vector.broadcast %55 : vector<1x256xi1> to vector<128x256xi1>
      %57 = vector.broadcast %cst_18 : f32 to vector<128x256xf32>
      %58 = arith.select %56, %22, %57 : vector<128x256xi1>, vector<128x256xf32>
      %cst_19 = arith.constant dense<0xFF800000> : vector<128xf32>
      %59 = vector.multi_reduction <maximumf>, %58, %cst_19 [1] : vector<128x256xf32> to vector<128xf32>
      %60 = vector.shape_cast %59 : vector<128xf32> to vector<128x1xf32>
      %c2_i32 = arith.constant 2 : i32
      %61 = arith.addi %24, %c2_i32 : i32
      %62 = arith.index_cast %61 : i32 to index
      %63 = memref.load %arg5[%62] : memref<108xi32, #tpu.memory_space<smem>>
      %c2_i32_20 = arith.constant 2 : i32
      %64 = arith.addi %24, %c2_i32_20 : i32
      %c1_i32_21 = arith.constant 1 : i32
      %65 = arith.addi %64, %c1_i32_21 : i32
      %66 = arith.index_cast %65 : i32 to index
      %67 = memref.load %arg5[%66] : memref<108xi32, #tpu.memory_space<smem>>
      %68 = vector.broadcast %63 : i32 to vector<1x256xi32>
      %69 = arith.cmpi sge, %23, %68 : vector<1x256xi32>
      %70 = vector.broadcast %67 : i32 to vector<1x256xi32>
      %71 = arith.cmpi slt, %23, %70 : vector<1x256xi32>
      %72 = arith.andi %69, %71 : vector<1x256xi1>
      %cst_22 = arith.constant 0.000000e+00 : f32
      %73 = vector.shape_cast %72 : vector<1x256xi1> to vector<1x256xi1>
      %74 = vector.broadcast %73 : vector<1x256xi1> to vector<128x256xi1>
      %75 = vector.broadcast %cst_22 : f32 to vector<128x256xf32>
      %76 = arith.select %74, %22, %75 : vector<128x256xi1>, vector<128x256xf32>
      %cst_23 = arith.constant dense<0xFF800000> : vector<128xf32>
      %77 = vector.multi_reduction <maximumf>, %76, %cst_23 [1] : vector<128x256xf32> to vector<128xf32>
      %78 = vector.shape_cast %77 : vector<128xf32> to vector<128x1xf32>
      %c3_i32 = arith.constant 3 : i32
      %79 = arith.addi %24, %c3_i32 : i32
      %80 = arith.index_cast %79 : i32 to index
      %81 = memref.load %arg5[%80] : memref<108xi32, #tpu.memory_space<smem>>
      %c3_i32_24 = arith.constant 3 : i32
      %82 = arith.addi %24, %c3_i32_24 : i32
      %c1_i32_25 = arith.constant 1 : i32
      %83 = arith.addi %82, %c1_i32_25 : i32
      %84 = arith.index_cast %83 : i32 to index
      %85 = memref.load %arg5[%84] : memref<108xi32, #tpu.memory_space<smem>>
      %86 = vector.broadcast %81 : i32 to vector<1x256xi32>
      %87 = arith.cmpi sge, %23, %86 : vector<1x256xi32>
      %88 = vector.broadcast %85 : i32 to vector<1x256xi32>
      %89 = arith.cmpi slt, %23, %88 : vector<1x256xi32>
      %90 = arith.andi %87, %89 : vector<1x256xi1>
      %cst_26 = arith.constant 0.000000e+00 : f32
      %91 = vector.shape_cast %90 : vector<1x256xi1> to vector<1x256xi1>
      %92 = vector.broadcast %91 : vector<1x256xi1> to vector<128x256xi1>
      %93 = vector.broadcast %cst_26 : f32 to vector<128x256xf32>
      %94 = arith.select %92, %22, %93 : vector<128x256xi1>, vector<128x256xf32>
      %cst_27 = arith.constant dense<0xFF800000> : vector<128xf32>
      %95 = vector.multi_reduction <maximumf>, %94, %cst_27 [1] : vector<128x256xf32> to vector<128xf32>
      %96 = vector.shape_cast %95 : vector<128xf32> to vector<128x1xf32>
      %c4_i32 = arith.constant 4 : i32
      %97 = arith.addi %24, %c4_i32 : i32
      %98 = arith.index_cast %97 : i32 to index
      %99 = memref.load %arg5[%98] : memref<108xi32, #tpu.memory_space<smem>>
      %c4_i32_28 = arith.constant 4 : i32
      %100 = arith.addi %24, %c4_i32_28 : i32
      %c1_i32_29 = arith.constant 1 : i32
      %101 = arith.addi %100, %c1_i32_29 : i32
      %102 = arith.index_cast %101 : i32 to index
      %103 = memref.load %arg5[%102] : memref<108xi32, #tpu.memory_space<smem>>
      %104 = vector.broadcast %99 : i32 to vector<1x256xi32>
      %105 = arith.cmpi sge, %23, %104 : vector<1x256xi32>
      %106 = vector.broadcast %103 : i32 to vector<1x256xi32>
      %107 = arith.cmpi slt, %23, %106 : vector<1x256xi32>
      %108 = arith.andi %105, %107 : vector<1x256xi1>
      %cst_30 = arith.constant 0.000000e+00 : f32
      %109 = vector.shape_cast %108 : vector<1x256xi1> to vector<1x256xi1>
      %110 = vector.broadcast %109 : vector<1x256xi1> to vector<128x256xi1>
      %111 = vector.broadcast %cst_30 : f32 to vector<128x256xf32>
      %112 = arith.select %110, %22, %111 : vector<128x256xi1>, vector<128x256xf32>
      %cst_31 = arith.constant dense<0xFF800000> : vector<128xf32>
      %113 = vector.multi_reduction <maximumf>, %112, %cst_31 [1] : vector<128x256xf32> to vector<128xf32>
      %114 = vector.shape_cast %113 : vector<128xf32> to vector<128x1xf32>
      %c5_i32 = arith.constant 5 : i32
      %115 = arith.addi %24, %c5_i32 : i32
      %116 = arith.index_cast %115 : i32 to index
      %117 = memref.load %arg5[%116] : memref<108xi32, #tpu.memory_space<smem>>
      %c5_i32_32 = arith.constant 5 : i32
      %118 = arith.addi %24, %c5_i32_32 : i32
      %c1_i32_33 = arith.constant 1 : i32
      %119 = arith.addi %118, %c1_i32_33 : i32
      %120 = arith.index_cast %119 : i32 to index
      %121 = memref.load %arg5[%120] : memref<108xi32, #tpu.memory_space<smem>>
      %122 = vector.broadcast %117 : i32 to vector<1x256xi32>
      %123 = arith.cmpi sge, %23, %122 : vector<1x256xi32>
      %124 = vector.broadcast %121 : i32 to vector<1x256xi32>
      %125 = arith.cmpi slt, %23, %124 : vector<1x256xi32>
      %126 = arith.andi %123, %125 : vector<1x256xi1>
      %cst_34 = arith.constant 0.000000e+00 : f32
      %127 = vector.shape_cast %126 : vector<1x256xi1> to vector<1x256xi1>
      %128 = vector.broadcast %127 : vector<1x256xi1> to vector<128x256xi1>
      %129 = vector.broadcast %cst_34 : f32 to vector<128x256xf32>
      %130 = arith.select %128, %22, %129 : vector<128x256xi1>, vector<128x256xf32>
      %cst_35 = arith.constant dense<0xFF800000> : vector<128xf32>
      %131 = vector.multi_reduction <maximumf>, %130, %cst_35 [1] : vector<128x256xf32> to vector<128xf32>
      %132 = vector.shape_cast %131 : vector<128xf32> to vector<128x1xf32>
      %c6_i32 = arith.constant 6 : i32
      %133 = arith.addi %24, %c6_i32 : i32
      %134 = arith.index_cast %133 : i32 to index
      %135 = memref.load %arg5[%134] : memref<108xi32, #tpu.memory_space<smem>>
      %c6_i32_36 = arith.constant 6 : i32
      %136 = arith.addi %24, %c6_i32_36 : i32
      %c1_i32_37 = arith.constant 1 : i32
      %137 = arith.addi %136, %c1_i32_37 : i32
      %138 = arith.index_cast %137 : i32 to index
      %139 = memref.load %arg5[%138] : memref<108xi32, #tpu.memory_space<smem>>
      %140 = vector.broadcast %135 : i32 to vector<1x256xi32>
      %141 = arith.cmpi sge, %23, %140 : vector<1x256xi32>
      %142 = vector.broadcast %139 : i32 to vector<1x256xi32>
      %143 = arith.cmpi slt, %23, %142 : vector<1x256xi32>
      %144 = arith.andi %141, %143 : vector<1x256xi1>
      %cst_38 = arith.constant 0.000000e+00 : f32
      %145 = vector.shape_cast %144 : vector<1x256xi1> to vector<1x256xi1>
      %146 = vector.broadcast %145 : vector<1x256xi1> to vector<128x256xi1>
      %147 = vector.broadcast %cst_38 : f32 to vector<128x256xf32>
      %148 = arith.select %146, %22, %147 : vector<128x256xi1>, vector<128x256xf32>
      %cst_39 = arith.constant dense<0xFF800000> : vector<128xf32>
      %149 = vector.multi_reduction <maximumf>, %148, %cst_39 [1] : vector<128x256xf32> to vector<128xf32>
      %150 = vector.shape_cast %149 : vector<128xf32> to vector<128x1xf32>
      %c7_i32 = arith.constant 7 : i32
      %151 = arith.addi %24, %c7_i32 : i32
      %152 = arith.index_cast %151 : i32 to index
      %153 = memref.load %arg5[%152] : memref<108xi32, #tpu.memory_space<smem>>
      %c7_i32_40 = arith.constant 7 : i32
      %154 = arith.addi %24, %c7_i32_40 : i32
      %c1_i32_41 = arith.constant 1 : i32
      %155 = arith.addi %154, %c1_i32_41 : i32
      %156 = arith.index_cast %155 : i32 to index
      %157 = memref.load %arg5[%156] : memref<108xi32, #tpu.memory_space<smem>>
      %158 = vector.broadcast %153 : i32 to vector<1x256xi32>
      %159 = arith.cmpi sge, %23, %158 : vector<1x256xi32>
      %160 = vector.broadcast %157 : i32 to vector<1x256xi32>
      %161 = arith.cmpi slt, %23, %160 : vector<1x256xi32>
      %162 = arith.andi %159, %161 : vector<1x256xi1>
      %cst_42 = arith.constant 0.000000e+00 : f32
      %163 = vector.shape_cast %162 : vector<1x256xi1> to vector<1x256xi1>
      %164 = vector.broadcast %163 : vector<1x256xi1> to vector<128x256xi1>
      %165 = vector.broadcast %cst_42 : f32 to vector<128x256xf32>
      %166 = arith.select %164, %22, %165 : vector<128x256xi1>, vector<128x256xf32>
      %cst_43 = arith.constant dense<0xFF800000> : vector<128xf32>
      %167 = vector.multi_reduction <maximumf>, %166, %cst_43 [1] : vector<128x256xf32> to vector<128xf32>
      %168 = vector.shape_cast %167 : vector<128xf32> to vector<128x1xf32>
      %c0_44 = arith.constant 0 : index
      %c0_45 = arith.constant 0 : index
      %169 = vector.load %arg12[%c0_44, %c0_45] : memref<128x8xf32, #tpu.memory_space<vmem>>, vector<128x8xf32>
      %170 = tpu.concatenate %42, %60, %78, %96, %114, %132, %150, %168 in 1 : vector<128x1xf32>, vector<128x1xf32>, vector<128x1xf32>, vector<128x1xf32>, vector<128x1xf32>, vector<128x1xf32>, vector<128x1xf32>, vector<128x1xf32> -> vector<128x8xf32>
      %171 = arith.maximumf %169, %170 : vector<128x8xf32>
      %c0_46 = arith.constant 0 : index
      %c0_47 = arith.constant 0 : index
      %172 = vector.load %arg12[%c0_46, %c0_47] : memref<128x8xf32, #tpu.memory_space<vmem>>, vector<128x8xf32>
      tpu.vector_store %arg12[%c0_46, %c0_47], %171 {strides = array<i32>} : memref<128x8xf32, #tpu.memory_space<vmem>>, vector<128x8xf32>,
    } else {
    }
    %10 = arith.index_cast %arg0 : i32 to index
    %11 = memref.load %arg3[%10] : memref<12xi32, #tpu.memory_space<smem>>
    %c1_i32_2 = arith.constant 1 : i32
    %12 = arith.cmpi eq, %11, %c1_i32_2 : i32
    %13 = arith.extui %12 : i1 to i32
    %c0_i32_3 = arith.constant 0 : i32
    %14 = arith.cmpi ne, %13, %c0_i32_3 : i32
    scf.if %14 {
      %c0 = arith.constant 0 : index
      %c0_4 = arith.constant 0 : index
      %15 = vector.load %arg12[%c0, %c0_4] : memref<128x8xf32, #tpu.memory_space<vmem>>, vector<128x8xf32>
      %c0_5 = arith.constant 0 : index
      %c0_6 = arith.constant 0 : index
      %16 = vector.load %arg9[%c0_5, %c0_6] : memref<128x128xf32, #tpu.memory_space<vmem>>, vector<128x128xf32>
      %cst = arith.constant dense<0.000000e+00> : vector<128x8xf32>
      %17 = tpu.matmul %16, %15, %cst {dimension_numbers = #tpu.dot_dimension_numbers<[1], [0], [0], [1], [0, 0, 1, 1], [], []>} : vector<128x128xf32>, vector<128x8xf32>, vector<128x8xf32> -> vector<128x8xf32>
      %c0_7 = arith.constant 0 : index
      %c0_8 = arith.constant 0 : index
      %18 = vector.load %arg10[%c0_7, %c0_8] : memref<128x1xf32, #tpu.memory_space<vmem>>, vector<128x1xf32>
      %19 = vector.broadcast %18 : vector<128x1xf32> to vector<128x8xf32>
      %20 = arith.addf %17, %19 : vector<128x8xf32>
      %cst_9 = arith.constant 0.000000e+00 : f32
      %21 = vector.broadcast %cst_9 : f32 to vector<128x8xf32>
      %22 = arith.maximumf %20, %21 : vector<128x8xf32>
      %c0_10 = arith.constant 0 : index
      %c0_11 = arith.constant 0 : index
      %c0_12 = arith.constant 0 : index
      %23 = vector.load %arg11[%c0_10, %c0_11, %c0_12] : memref<1x128x8xf32, #tpu.memory_space<vmem>>, vector<1x128x8xf32>
      %24 = vector.shape_cast %23 : vector<1x128x8xf32> to vector<128x8xf32>
      %25 = vector.shape_cast %22 : vector<128x8xf32> to vector<1x128x8xf32>
      tpu.vector_store %arg11[%c0_10, %c0_11, %c0_12], %25 {strides = array<i32>} : memref<1x128x8xf32, #tpu.memory_space<vmem>>, vector<1x128x8xf32>,
    } else {
    }
    return
  }
  func.func @transform_0(%arg0: i32, %arg1: memref<12xi32, #tpu.memory_space<smem>>, %arg2: memref<12xi32, #tpu.memory_space<smem>>, %arg3: memref<12xi32, #tpu.memory_space<smem>>, %arg4: memref<12xi32, #tpu.memory_space<smem>>, %arg5: memref<108xi32, #tpu.memory_space<smem>>) -> (i32, i32) {
    %c0_i32 = arith.constant 0 : i32
    %c0_i32_0 = arith.constant 0 : i32
    return %c0_i32, %arg0 : i32, i32
  }
  func.func @transform_1(%arg0: i32, %arg1: memref<12xi32, #tpu.memory_space<smem>>, %arg2: memref<12xi32, #tpu.memory_space<smem>>, %arg3: memref<12xi32, #tpu.memory_space<smem>>, %arg4: memref<12xi32, #tpu.memory_space<smem>>, %arg5: memref<108xi32, #tpu.memory_space<smem>>) -> (i32, i32) {
    %c0_i32 = arith.constant 0 : i32
    %c0_i32_0 = arith.constant 0 : i32
    %c0_i32_1 = arith.constant 0 : i32
    return %c0_i32, %c0_i32_0 : i32, i32
  }
  func.func @transform_2(%arg0: i32, %arg1: memref<12xi32, #tpu.memory_space<smem>>, %arg2: memref<12xi32, #tpu.memory_space<smem>>, %arg3: memref<12xi32, #tpu.memory_space<smem>>, %arg4: memref<12xi32, #tpu.memory_space<smem>>, %arg5: memref<108xi32, #tpu.memory_space<smem>>) -> (i32, i32) {
    %c0_i32 = arith.constant 0 : i32
    %c0_i32_0 = arith.constant 0 : i32
    %c0_i32_1 = arith.constant 0 : i32
    return %c0_i32, %c0_i32_0 : i32, i32
  }
  func.func @transform_3(%arg0: i32, %arg1: memref<12xi32, #tpu.memory_space<smem>>, %arg2: memref<12xi32, #tpu.memory_space<smem>>, %arg3: memref<12xi32, #tpu.memory_space<smem>>, %arg4: memref<12xi32, #tpu.memory_space<smem>>, %arg5: memref<108xi32, #tpu.memory_space<smem>>) -> (i32, i32) {
    %c0_i32 = arith.constant 0 : i32
    %c0_i32_0 = arith.constant 0 : i32
    %c0_i32_1 = arith.constant 0 : i32
    return %c0_i32, %c0_i32_0 : i32, i32
  }
  func.func @transform_4(%arg0: i32, %arg1: memref<12xi32, #tpu.memory_space<smem>>, %arg2: memref<12xi32, #tpu.memory_space<smem>>, %arg3: memref<12xi32, #tpu.memory_space<smem>>, %arg4: memref<12xi32, #tpu.memory_space<smem>>, %arg5: memref<108xi32, #tpu.memory_space<smem>>) -> (i32, i32) {
    %c0_i32 = arith.constant 0 : i32
    %c0_i32_0 = arith.constant 0 : i32
    %c0_i32_1 = arith.constant 0 : i32
    return %c0_i32, %c0_i32_0 : i32, i32
  }
  func.func @transform_5(%arg0: i32, %arg1: memref<12xi32, #tpu.memory_space<smem>>, %arg2: memref<12xi32, #tpu.memory_space<smem>>, %arg3: memref<12xi32, #tpu.memory_space<smem>>, %arg4: memref<12xi32, #tpu.memory_space<smem>>, %arg5: memref<108xi32, #tpu.memory_space<smem>>) -> (i32, i32, i32) {
    %0 = arith.index_cast %arg0 : i32 to index
    %1 = memref.load %arg1[%0] : memref<12xi32, #tpu.memory_space<smem>>
    %c0_i32 = arith.constant 0 : i32
    %c0_i32_0 = arith.constant 0 : i32
    %c0_i32_1 = arith.constant 0 : i32
    return %1, %c0_i32, %c0_i32_0 : i32, i32, i32
  }
}

</mosaic_0001>

<llo_original>
// kernel: tpu_custom_call.1
$region0: #{tpu_custom_call.1}
  #allocation0 [shape = 'u32[]', space=smem, size = 0x4, offset = 0x4, fixed_abs, tag = 'smem constant byte address 0x4 - core index']
  #allocation1 [shape = 'u32[144,128]{1,0:T(1,128)}', space=vmem, size = 0x12000, scoped, tag = 'internal scratch']
  #allocation2 [shape = 'f32[128,8]{1,0:T(8,128)}', space=vmem, size = 0x10000, scoped, tag = 'scratch operand']
  #allocation3 [shape = 's32[1]{0}', space=sflag, size = 0x4, scoped, tag = 'scoped memory for tpu_custom_call.1']
  #allocation4 [shape = 'u8[512]{0}', space=smem, size = 0x200, scoped, tag = 'prefetched SMEM operand 0']
  #allocation5 [shape = 'u8[512]{0}', space=smem, size = 0x200, scoped, tag = 'prefetched SMEM operand 1']
  #allocation6 [shape = 'u8[512]{0}', space=smem, size = 0x200, scoped, tag = 'prefetched SMEM operand 2']
  #allocation7 [shape = 'u8[512]{0}', space=smem, size = 0x200, scoped, tag = 'prefetched SMEM operand 3']
  #allocation8 [shape = 'u8[512]{0}', space=smem, size = 0x200, scoped, tag = 'prefetched SMEM operand 4']
  %s0 = inlined_call_operand.vmem [shape: s32[12], index: 0, kind: input, shape index: {}]
  %s1 = inlined_call_operand.vmem [shape: s32[12], index: 1, kind: input, shape index: {}]
  %s2 = inlined_call_operand.vmem [shape: s32[12], index: 2, kind: input, shape index: {}]
  %s3 = inlined_call_operand.vmem [shape: s32[12], index: 3, kind: input, shape index: {}]
  %s4 = inlined_call_operand.vmem [shape: s32[108], index: 4, kind: input, shape index: {}]
  %s5 = inlined_call_operand.vmem [shape: f32[8,3072], index: 5, kind: input, shape index: {}]
  %s6 = inlined_call_operand.vmem [shape: f32[128,8], index: 6, kind: input, shape index: {}]
  %s7 = inlined_call_operand.vmem [shape: f32[128,1], index: 7, kind: input, shape index: {}]
  %s8 = inlined_call_operand.vmem [shape: f32[128,128], index: 8, kind: input, shape index: {}]
  %s9 = inlined_call_operand.vmem [shape: f32[128,1], index: 9, kind: input, shape index: {}]
  %s10 = inlined_call_operand.vmem [shape: f32[4,128,8], index: 10, kind: output, shape index: {}]
  %s11 = sld [smem:[#allocation0]]
  $region65: #{tpu_custom_call.1} parent=0
    _
  %s13 = ssub.s32 1, %s11
  %s14 = scalar_select 0, %s13, %s11
  %s15 = sshll.u32 %s0, 4
  %s16 = int_to_ptr.vmem [resolvable:$true] %s15
  %18 = dma.vmem_to_smem %s16, 16, [#allocation4], [#allocation3]
  %s19 = sshll.u32 %s1, 4
  %s20 = int_to_ptr.vmem [resolvable:$true] %s19
  %22 = dma.vmem_to_smem %s20, 16, [#allocation5], [#allocation3]
  %s23 = sshll.u32 %s2, 4
  %s24 = int_to_ptr.vmem [resolvable:$true] %s23
  %26 = dma.vmem_to_smem %s24, 16, [#allocation6], [#allocation3]
  %s27 = sshll.u32 %s3, 4
  %s28 = int_to_ptr.vmem [resolvable:$true] %s27
  %30 = dma.vmem_to_smem %s28, 16, [#allocation7], [#allocation3]
  %s31 = sshll.u32 %s4, 4
  %s32 = int_to_ptr.vmem [resolvable:$true] %s31
  %34 = dma.vmem_to_smem %s32, 16, [#allocation8], [#allocation3]
  %35 = dma.done [#allocation3], 80
  %36 = sfence
  loop: start=0, step=1, limit=14
  $region2: #{tpu_custom_call.1} parent=0 // loop_pre_header
    _
  $region3: #{tpu_custom_call.1} parent=0 // loop_header
    %s38 = sphi 0, %s42
    %p39 = scmp.ge.s32.totalorder %s38, 14
    %s48 = sphi 0, %s50
    %s51 = sphi 0, %s48
    %s52 = sphi 0, %s51
    %s68 = sphi 0, %s52
    %s72 = sphi 0, %s72
    %s74 = sphi 0, %s72
    %s75 = sphi 0, %s74
    %s89 = sphi 0, %s75
    %s93 = sphi 0, %s93
    %s95 = sphi 0, %s93
    %s96 = sphi 0, %s95
    %s110 = sphi 0, %s96
    %s114 = sphi 0, %s114
    %s116 = sphi 0, %s114
    %s117 = sphi 0, %s116
    %s131 = sphi 0, %s117
    %s135 = sphi 0, %s135
    %s137 = sphi 0, %s135
    %s138 = sphi 0, %s137
    %s152 = sphi 0, %s138
    %s160 = sphi 0, %s162
    %s163 = sphi 0, %s160
    %s164 = sphi 0, %s163
    %s180 = sphi 0, %s164
  $region4: #{tpu_custom_call.1} parent=0 // loop_header_branch
    %41 = sbr.rel (%p39) target = $region8
  $region5: #{tpu_custom_call.1} parent=0 // loop_body
    %s43 = ssub.s32 %s38, 1
    %s44 = ssub.s32 %s38, 2
    %s45 = sadd.s32 %s38, 1
    %s46 = ssub.s32 %s38, %s45
    %p47 = scmp.eq.s32.totalorder %s46, 0
    %s49 = sadd.s32 %s48, 1
    %s50 = scalar_select %p47, %s48, %s49
    %p53 = pneg %p47
    %p54 = scmp.eq.s32.totalorder %s38, 11
    %p55 = por %p53, %p54
    %p56 = scmp.ne.s32.totalorder %s48, %s51
    %p57 = scmp.eq.s32.totalorder %s38, 0
    %p58 = por %p56, %p57
    %p59 = scmp.ne.s32.totalorder %s48, %s51
    %p60 = scmp.eq.s32.totalorder %s43, 11
    %p61 = por %p59, %p60
    %p62 = scmp.ne.s32.totalorder %s51, %s52
    %p63 = scmp.eq.s32.totalorder %s43, 0
    %p64 = por %p62, %p63
    %p65 = scmp.ne.s32.totalorder %s51, %s52
    %p66 = scmp.eq.s32.totalorder %s44, 11
    %p67 = por %p65, %p66
    %p69 = scmp.ne.s32.totalorder %s52, %s68
    %p70 = scmp.eq.s32.totalorder %s44, 0
    %p71 = por %p69, %p70
    %s73 = sadd.s32 %s72, 1
    %p76 = scmp.eq.s32.totalorder %s38, 11
    %p77 = scmp.ne.s32.totalorder %s72, %s74
    %p78 = scmp.eq.s32.totalorder %s38, 0
    %p79 = por %p77, %p78
    %p80 = scmp.ne.s32.totalorder %s72, %s74
    %p81 = scmp.eq.s32.totalorder %s43, 11
    %p82 = por %p80, %p81
    %p83 = scmp.ne.s32.totalorder %s74, %s75
    %p84 = scmp.eq.s32.totalorder %s43, 0
    %p85 = por %p83, %p84
    %p86 = scmp.ne.s32.totalorder %s74, %s75
    %p87 = scmp.eq.s32.totalorder %s44, 11
    %p88 = por %p86, %p87
    %p90 = scmp.ne.s32.totalorder %s75, %s89
    %p91 = scmp.eq.s32.totalorder %s44, 0
    %p92 = por %p90, %p91
    %s94 = sadd.s32 %s93, 1
    %p97 = scmp.eq.s32.totalorder %s38, 11
    %p98 = scmp.ne.s32.totalorder %s93, %s95
    %p99 = scmp.eq.s32.totalorder %s38, 0
    %p100 = por %p98, %p99
    %p101 = scmp.ne.s32.totalorder %s93, %s95
    %p102 = scmp.eq.s32.totalorder %s43, 11
    %p103 = por %p101, %p102
    %p104 = scmp.ne.s32.totalorder %s95, %s96
    %p105 = scmp.eq.s32.totalorder %s43, 0
    %p106 = por %p104, %p105
    %p107 = scmp.ne.s32.totalorder %s95, %s96
    %p108 = scmp.eq.s32.totalorder %s44, 11
    %p109 = por %p107, %p108
    %p111 = scmp.ne.s32.totalorder %s96, %s110
    %p112 = scmp.eq.s32.totalorder %s44, 0
    %p113 = por %p111, %p112
    %s115 = sadd.s32 %s114, 1
    %p118 = scmp.eq.s32.totalorder %s38, 11
    %p119 = scmp.ne.s32.totalorder %s114, %s116
    %p120 = scmp.eq.s32.totalorder %s38, 0
    %p121 = por %p119, %p120
    %p122 = scmp.ne.s32.totalorder %s114, %s116
    %p123 = scmp.eq.s32.totalorder %s43, 11
    %p124 = por %p122, %p123
    %p125 = scmp.ne.s32.totalorder %s116, %s117
    %p126 = scmp.eq.s32.totalorder %s43, 0
    %p127 = por %p125, %p126
    %p128 = scmp.ne.s32.totalorder %s116, %s117
    %p129 = scmp.eq.s32.totalorder %s44, 11
    %p130 = por %p128, %p129
    %p132 = scmp.ne.s32.totalorder %s117, %s131
    %p133 = scmp.eq.s32.totalorder %s44, 0
    %p134 = por %p132, %p133
    %s136 = sadd.s32 %s135, 1
    %p139 = scmp.eq.s32.totalorder %s38, 11
    %p140 = scmp.ne.s32.totalorder %s135, %s137
    %p141 = scmp.eq.s32.totalorder %s38, 0
    %p142 = por %p140, %p141
    %p143 = scmp.ne.s32.totalorder %s135, %s137
    %p144 = scmp.eq.s32.totalorder %s43, 11
    %p145 = por %p143, %p144
    %p146 = scmp.ne.s32.totalorder %s137, %s138
    %p147 = scmp.eq.s32.totalorder %s43, 0
    %p148 = por %p146, %p147
    %p149 = scmp.ne.s32.totalorder %s137, %s138
    %p150 = scmp.eq.s32.totalorder %s44, 11
    %p151 = por %p149, %p150
    %p153 = scmp.ne.s32.totalorder %s138, %s152
    %p154 = scmp.eq.s32.totalorder %s44, 0
    %p155 = por %p153, %p154
    %s156 = sld [smem:[#allocation4 + %s38]]
    %s157 = sld [smem:[#allocation4 + %s45]]
    %s158 = ssub.s32 %s156, %s157
    %p159 = scmp.eq.s32.totalorder %s158, 0
    %s161 = sadd.s32 %s160, 1
    %s162 = scalar_select %p159, %s160, %s161
    %p165 = pneg %p159
    %p166 = scmp.eq.s32.totalorder %s38, 11
    %p167 = por %p165, %p166
    %p168 = scmp.ne.s32.totalorder %s160, %s163
    %p169 = scmp.eq.s32.totalorder %s38, 0
    %p170 = por %p168, %p169
    %p171 = scmp.ne.s32.totalorder %s160, %s163
    %p172 = scmp.eq.s32.totalorder %s43, 11
    %p173 = por %p171, %p172
    %p174 = scmp.ne.s32.totalorder %s163, %s164
    %p175 = scmp.eq.s32.totalorder %s43, 0
    %p176 = por %p174, %p175
    %p177 = scmp.ne.s32.totalorder %s163, %s164
    %p178 = scmp.eq.s32.totalorder %s44, 11
    %p179 = por %p177, %p178
    %p181 = scmp.ne.s32.totalorder %s164, %s180
    %p182 = scmp.eq.s32.totalorder %s44, 0
    %p183 = por %p181, %p182
    %p184 = scmp.le.s32.totalorder 1, %s38
    %p185 = scmp.lt.s32.totalorder %s38, 13
    %p186 = pnand %p184, %p185
    %p187 = pneg %p186
    // Predicated region
    $region9: #{tpu_custom_call.1} parent=5 // pred_check
      _
    $region10: #{tpu_custom_call.1} parent=5 // pred_check_branch
      %189 = sbr.rel (%p186) target = $region12
    $region11: #{tpu_custom_call.1} parent=5 // pred_region
      %s190 = ssub.s32 %s38, 1
      // Predicated region
      $region13: #{tpu_custom_call.1} parent=11 // pred_check
        %p191 = pneg %p85
      $region14: #{tpu_custom_call.1} parent=11 // pred_check_branch
        %193 = sbr.rel (%p191) target = $region16
      $region15: #{tpu_custom_call.1} parent=11 // pred_region
        _
      $region16: #{tpu_custom_call.1} parent=11 // pred_fallthru
        _
      // Predicated region
      $region17: #{tpu_custom_call.1} parent=11 // pred_check
        %p194 = pneg %p106
      $region18: #{tpu_custom_call.1} parent=11 // pred_check_branch
        %196 = sbr.rel (%p194) target = $region20
      $region19: #{tpu_custom_call.1} parent=11 // pred_region
        _
      $region20: #{tpu_custom_call.1} parent=11 // pred_fallthru
        _
      // Predicated region
      $region21: #{tpu_custom_call.1} parent=11 // pred_check
        %p197 = pneg %p127
      $region22: #{tpu_custom_call.1} parent=11 // pred_check_branch
        %199 = sbr.rel (%p197) target = $region24
      $region23: #{tpu_custom_call.1} parent=11 // pred_region
        _
      $region24: #{tpu_custom_call.1} parent=11 // pred_fallthru
        _
      // Predicated region
      $region25: #{tpu_custom_call.1} parent=11 // pred_check
        %p200 = pneg %p148
      $region26: #{tpu_custom_call.1} parent=11 // pred_check_branch
        %202 = sbr.rel (%p200) target = $region28
      $region27: #{tpu_custom_call.1} parent=11 // pred_region
        _
      $region28: #{tpu_custom_call.1} parent=11 // pred_fallthru
        _
    $region12: #{tpu_custom_call.1} parent=5 // pred_fallthru
      _
    %p203 = scmp.lt.s32.totalorder %s38, 12
    // Predicated region
    $region29: #{tpu_custom_call.1} parent=5 // pred_check
      %p204 = pneg %p203
    $region30: #{tpu_custom_call.1} parent=5 // pred_check_branch
      %206 = sbr.rel (%p204) target = $region32
    $region31: #{tpu_custom_call.1} parent=5 // pred_region
      // Predicated region
      $region33: #{tpu_custom_call.1} parent=31 // pred_check
        %p207 = pneg %p58
      $region34: #{tpu_custom_call.1} parent=31 // pred_check_branch
        %209 = sbr.rel (%p207) target = $region36
      $region35: #{tpu_custom_call.1} parent=31 // pred_region
        %s210 = smul.u32 2, %s38
        %p211 = scmp.lt.s32.totalorder %s210, 23
        %s212 = scalar_select %p211, %s210, 23
        %s213 = smul.addr %s212, 8
        %s214 = scalar_lea.vmem %s5, %s213
        %s215 = smul.u32 2, %s38
      $region36: #{tpu_custom_call.1} parent=31 // pred_fallthru
        _
    $region32: #{tpu_custom_call.1} parent=5 // pred_fallthru
      _
    %p216 = scmp.le.s32.totalorder 1, %s38
    %p217 = scmp.lt.s32.totalorder %s38, 13
    %p218 = pnand %p216, %p217
    %p219 = pneg %p218
    // Predicated region
    $region37: #{tpu_custom_call.1} parent=5 // pred_check
      _
    $region38: #{tpu_custom_call.1} parent=5 // pred_check_branch
      %221 = sbr.rel (%p218) target = $region40
    $region39: #{tpu_custom_call.1} parent=5 // pred_region
      %s222 = ssub.s32 %s38, 1
      %s223 = smul.u32 2, %s43
      %p224 = scmp.lt.s32.totalorder %s223, 23
      %s225 = scalar_select %p224, %s223, 23
      %s226 = smul.addr %s225, 8
      %s227 = scalar_lea.vmem %s5, %s226
      %p228 = pneg %p64
      %p229 = pneg %p61
      %p230 = pneg %p85
      %p231 = pneg %p82
      %p232 = pneg %p106
      %p233 = pneg %p103
      %p234 = pneg %p127
      %p235 = pneg %p124
      %p236 = pneg %p148
      %p237 = pneg %p145
      %p238 = pneg %p176
      %p239 = pneg %p173
      %s240 = sld [smem:[#allocation4 + %s43]]
      %p241 = scmp.lt.s32.totalorder %s240, 3
      %s242 = scalar_select %p241, %s240, 3
      %s243 = smul.addr %s242, 16
      %s244 = smul.addr %s243, 8
      %s245 = scalar_lea.vmem %s10, %s244
      %s246 = smul.u32 2, %s43
      %p247 = scmp.lt.s32.totalorder %s246, 23
      %s248 = scalar_select %p247, %s246, 23
      %s249 = smul.addr %s248, 8
      %s250 = scalar_lea.vmem %s5, %s249
      %s251 = smul.u32 2, %s43
      %s252 = sld [smem:[#allocation4 + %s43]]
      %p253 = scmp.lt.s32.totalorder %s252, 3
      %s254 = scalar_select %p253, %s252, 3
      %s255 = smul.addr %s254, 16
      %s256 = smul.addr %s255, 8
      %s257 = scalar_lea.vmem %s10, %s256
      %s258 = sld [smem:[#allocation4 + %s43]]
      %s259 = sld [smem:[#allocation5 + %s43]]
      %p260 = scmp.eq.s32.totalorder %s259, 1
      // Predicated region
      $region41: #{tpu_custom_call.1} parent=39 // pred_check
        %p261 = pneg %p260
      $region42: #{tpu_custom_call.1} parent=39 // pred_check_branch
        %263 = sbr.rel (%p261) target = $region44
      $region43: #{tpu_custom_call.1} parent=39 // pred_region
        %vm264 = vcmask 64512
        %265 = vst.msk [vmem:[#allocation2] sm:$0xff] %vm264, 0.0
        %266 = vst.msk [vmem:[#allocation2 + $0x8] sm:$0xff] %vm264, 0.0
        %267 = vst.msk [vmem:[#allocation2 + $0x10] sm:$0xff] %vm264, 0.0
        %268 = vst.msk [vmem:[#allocation2 + $0x18] sm:$0xff] %vm264, 0.0
        %269 = vst.msk [vmem:[#allocation2 + $0x20] sm:$0xff] %vm264, 0.0
        %270 = vst.msk [vmem:[#allocation2 + $0x28] sm:$0xff] %vm264, 0.0
        %271 = vst.msk [vmem:[#allocation2 + $0x30] sm:$0xff] %vm264, 0.0
        %272 = vst.msk [vmem:[#allocation2 + $0x38] sm:$0xff] %vm264, 0.0
        %273 = vst.msk [vmem:[#allocation2 + $0x40] sm:$0xff] %vm264, 0.0
        %274 = vst.msk [vmem:[#allocation2 + $0x48] sm:$0xff] %vm264, 0.0
        %275 = vst.msk [vmem:[#allocation2 + $0x50] sm:$0xff] %vm264, 0.0
        %276 = vst.msk [vmem:[#allocation2 + $0x58] sm:$0xff] %vm264, 0.0
        %277 = vst.msk [vmem:[#allocation2 + $0x60] sm:$0xff] %vm264, 0.0
        %278 = vst.msk [vmem:[#allocation2 + $0x68] sm:$0xff] %vm264, 0.0
        %279 = vst.msk [vmem:[#allocation2 + $0x70] sm:$0xff] %vm264, 0.0
        %280 = vst.msk [vmem:[#allocation2 + $0x78] sm:$0xff] %vm264, 0.0
      $region44: #{tpu_custom_call.1} parent=39 // pred_fallthru
        _
      %s281 = sld [smem:[#allocation7 + %s43]]
      %p282 = scmp.eq.s32.totalorder %s281, 1
      // Predicated region
      $region45: #{tpu_custom_call.1} parent=39 // pred_check
        %p283 = pneg %p282
      $region46: #{tpu_custom_call.1} parent=39 // pred_check_branch
        %285 = sbr.rel (%p283) target = $region48
      $region47: #{tpu_custom_call.1} parent=39 // pred_region
        %v286 = vld [vmem:[%s6] sm:$0xff]
        %v287 = vld [vmem:[%s6 + $0x8] sm:$0xff]
        %v288 = vld [vmem:[%s6 + $0x10] sm:$0xff]
        %v289 = vld [vmem:[%s6 + $0x18] sm:$0xff]
        %v290 = vld [vmem:[%s6 + $0x20] sm:$0xff]
        %v291 = vld [vmem:[%s6 + $0x28] sm:$0xff]
        %v292 = vld [vmem:[%s6 + $0x30] sm:$0xff]
        %v293 = vld [vmem:[%s6 + $0x38] sm:$0xff]
        %v294 = vld [vmem:[%s6 + $0x40] sm:$0xff]
        %v295 = vld [vmem:[%s6 + $0x48] sm:$0xff]
        %v296 = vld [vmem:[%s6 + $0x50] sm:$0xff]
        %v297 = vld [vmem:[%s6 + $0x58] sm:$0xff]
        %v298 = vld [vmem:[%s6 + $0x60] sm:$0xff]
        %v299 = vld [vmem:[%s6 + $0x68] sm:$0xff]
        %v300 = vld [vmem:[%s6 + $0x70] sm:$0xff]
        %v301 = vld [vmem:[%s6 + $0x78] sm:$0xff]
        %v302 = vld [vmem:[%s250] sm:$0xff]
        %v303 = vld [vmem:[%s250 + $0x8] sm:$0xff]
        %v304 = vld [vmem:[%s7] sm:$0xff]
        %v305 = vld [vmem:[%s7 + $0x8] sm:$0xff]
        %v306 = vld [vmem:[%s7 + $0x10] sm:$0xff]
        %v307 = vld [vmem:[%s7 + $0x18] sm:$0xff]
        %v308 = vld [vmem:[%s7 + $0x20] sm:$0xff]
        %v309 = vld [vmem:[%s7 + $0x28] sm:$0xff]
        %v310 = vld [vmem:[%s7 + $0x30] sm:$0xff]
        %v311 = vld [vmem:[%s7 + $0x38] sm:$0xff]
        %v312 = vld [vmem:[%s7 + $0x40] sm:$0xff]
        %v313 = vld [vmem:[%s7 + $0x48] sm:$0xff]
        %v314 = vld [vmem:[%s7 + $0x50] sm:$0xff]
        %v315 = vld [vmem:[%s7 + $0x58] sm:$0xff]
        %v316 = vld [vmem:[%s7 + $0x60] sm:$0xff]
        %v317 = vld [vmem:[%s7 + $0x68] sm:$0xff]
        %v318 = vld [vmem:[%s7 + $0x70] sm:$0xff]
        %v319 = vld [vmem:[%s7 + $0x78] sm:$0xff]
        %321 = vset.pattern.permute.xlu0 0
        %322 = vperm.xlu0 %321, %v304
        %v323 = vpop.permute.xlu0 %322
        %326 = vset.pattern.permute.xlu0 0
        %327 = vperm.xlu0 %326, %v305
        %v328 = vpop.permute.xlu0 %327
        %331 = vset.pattern.permute.xlu0 0
        %332 = vperm.xlu0 %331, %v306
        %v333 = vpop.permute.xlu0 %332
        %336 = vset.pattern.permute.xlu0 0
        %337 = vperm.xlu0 %336, %v307
        %v338 = vpop.permute.xlu0 %337
        %341 = vset.pattern.permute.xlu0 0
        %342 = vperm.xlu0 %341, %v308
        %v343 = vpop.permute.xlu0 %342
        %346 = vset.pattern.permute.xlu0 0
        %347 = vperm.xlu0 %346, %v309
        %v348 = vpop.permute.xlu0 %347
        %351 = vset.pattern.permute.xlu0 0
        %352 = vperm.xlu0 %351, %v310
        %v353 = vpop.permute.xlu0 %352
        %356 = vset.pattern.permute.xlu0 0
        %357 = vperm.xlu0 %356, %v311
        %v358 = vpop.permute.xlu0 %357
        %361 = vset.pattern.permute.xlu0 0
        %362 = vperm.xlu0 %361, %v312
        %v363 = vpop.permute.xlu0 %362
        %366 = vset.pattern.permute.xlu0 0
        %367 = vperm.xlu0 %366, %v313
        %v368 = vpop.permute.xlu0 %367
        %371 = vset.pattern.permute.xlu0 0
        %372 = vperm.xlu0 %371, %v314
        %v373 = vpop.permute.xlu0 %372
        %376 = vset.pattern.permute.xlu0 0
        %377 = vperm.xlu0 %376, %v315
        %v378 = vpop.permute.xlu0 %377
        %381 = vset.pattern.permute.xlu0 0
        %382 = vperm.xlu0 %381, %v316
        %v383 = vpop.permute.xlu0 %382
        %386 = vset.pattern.permute.xlu0 0
        %387 = vperm.xlu0 %386, %v317
        %v388 = vpop.permute.xlu0 %387
        %391 = vset.pattern.permute.xlu0 0
        %392 = vperm.xlu0 %391, %v318
        %v393 = vpop.permute.xlu0 %392
        %396 = vset.pattern.permute.xlu0 0
        %397 = vperm.xlu0 %396, %v319
        %v398 = vpop.permute.xlu0 %397
        %vm400 = vcmask 64512
        %v402 = vsel %vm400, %v286, 0
        %v405 = vsel %vm400, %v287, 0
        %v408 = vsel %vm400, %v288, 0
        %v411 = vsel %vm400, %v289, 0
        %v414 = vsel %vm400, %v290, 0
        %v417 = vsel %vm400, %v291, 0
        %v420 = vsel %vm400, %v292, 0
        %v423 = vsel %vm400, %v293, 0
        %v426 = vsel %vm400, %v294, 0
        %v429 = vsel %vm400, %v295, 0
        %v432 = vsel %vm400, %v296, 0
        %v435 = vsel %vm400, %v297, 0
        %v438 = vsel %vm400, %v298, 0
        %v441 = vsel %vm400, %v299, 0
        %v444 = vsel %vm400, %v300, 0
        %v447 = vsel %vm400, %v301, 0
        %449 = vmatprep.subr.mxu0 %v303
        %450 = vmatpush1.msra.mxu0 %v302
        %451 = vmatprep.subr.mxu0 0.0
        %452 = vmatpush1.msra.mxu0 0.0
        %453 = vmatprep.subr.mxu0 0.0
        %454 = vmatpush1.msra.mxu0 0.0
        %455 = vmatprep.subr.mxu0 0.0
        %456 = vmatpush1.msra.mxu0 0.0
        %457 = vmatprep.subr.mxu0 0.0
        %458 = vmatpush1.msra.mxu0 0.0
        %459 = vmatprep.subr.mxu0 0.0
        %460 = vmatpush1.msra.mxu0 0.0
        %461 = vmatprep.subr.mxu0 0.0
        %462 = vmatpush1.msra.mxu0 0.0
        %463 = vmatprep.subr.mxu0 0.0
        %464 = vmatpush1.msra.mxu0 0.0
        %465 = vmatprep.subr.mxu0 0.0
        %466 = vmatpush1.msra.mxu0 0.0
        %467 = vmatprep.subr.mxu0 0.0
        %468 = vmatpush1.msra.mxu0 0.0
        %469 = vmatprep.subr.mxu0 0.0
        %470 = vmatpush1.msra.mxu0 0.0
        %471 = vmatprep.subr.mxu0 0.0
        %472 = vmatpush1.msra.mxu0 0.0
        %473 = vmatprep.subr.mxu0 0.0
        %474 = vmatpush1.msra.mxu0 0.0
        %475 = vmatprep.subr.mxu0 0.0
        %476 = vmatpush1.msra.mxu0 0.0
        %477 = vmatprep.subr.mxu0 0.0
        %478 = vmatpush1.msra.mxu0 0.0
        %479 = vmatprep.subr.mxu0 0.0
        %480 = vmatpush1.msra.mxu0 0.0
        %481 = vmatprep.subr.mxu0 0.0
        %482 = vmatpush1.msra.mxu0 0.0
        %483 = vmatprep.subr.mxu0 0.0
        %484 = vmatpush1.msra.mxu0 0.0
        %485 = vmatprep.subr.mxu0 0.0
        %486 = vmatpush1.msra.mxu0 0.0
        %487 = vmatprep.subr.mxu0 0.0
        %488 = vmatpush1.msra.mxu0 0.0
        %489 = vmatprep.subr.mxu0 0.0
        %490 = vmatpush1.msra.mxu0 0.0
        %491 = vmatprep.subr.mxu0 0.0
        %492 = vmatpush1.msra.mxu0 0.0
        %493 = vmatprep.subr.mxu0 0.0
        %494 = vmatpush1.msra.mxu0 0.0
        %495 = vmatprep.subr.mxu0 0.0
        %496 = vmatpush1.msra.mxu0 0.0
        %497 = vmatprep.subr.mxu0 0.0
        %498 = vmatpush1.msra.mxu0 0.0
        %499 = vmatprep.subr.mxu0 0.0
        %500 = vmatpush1.msra.mxu0 0.0
        %501 = vmatprep.subr.mxu0 0.0
        %502 = vmatpush1.msra.mxu0 0.0
        %503 = vmatprep.subr.mxu0 0.0
        %504 = vmatpush1.msra.mxu0 0.0
        %505 = vmatprep.subr.mxu0 0.0
        %506 = vmatpush1.msra.mxu0 0.0
        %507 = vmatprep.subr.mxu0 0.0
        %508 = vmatpush1.msra.mxu0 0.0
        %509 = vmatprep.subr.mxu0 0.0
        %510 = vmatpush1.msra.mxu0 0.0
        %511 = vmatprep.subr.mxu0 0.0
        %512 = vmatpush1.msra.mxu0 0.0
        %513 = vmatprep.mubr.f32.mxu0 0.0
        %514 = vmatmul.mubr.f32.gmra.mrb[0].mxu0 %v402
        %v515 = vpop.f32.mrb[0].mxu0
        %v516 = vadd.f32 %v323, %v515
        %v517 = vpop.f32.mrb[0].mxu0
        %v518 = vadd.f32 %v323, %v517
        %519 = vmatprep.mubr.f32.mxu0 0.0
        %520 = vmatmul.mubr.f32.gmra.mrb[0].mxu0 %v405
        %v521 = vpop.f32.mrb[0].mxu0
        %v522 = vadd.f32 %v328, %v521
        %v523 = vpop.f32.mrb[0].mxu0
        %v524 = vadd.f32 %v328, %v523
        %525 = vmatprep.mubr.f32.mxu0 0.0
        %526 = vmatmul.mubr.f32.gmra.mrb[0].mxu0 %v408
        %v527 = vpop.f32.mrb[0].mxu0
        %v528 = vadd.f32 %v333, %v527
        %v529 = vpop.f32.mrb[0].mxu0
        %v530 = vadd.f32 %v333, %v529
        %531 = vmatprep.mubr.f32.mxu0 0.0
        %532 = vmatmul.mubr.f32.gmra.mrb[0].mxu0 %v411
        %v533 = vpop.f32.mrb[0].mxu0
        %v534 = vadd.f32 %v338, %v533
        %v535 = vpop.f32.mrb[0].mxu0
        %v536 = vadd.f32 %v338, %v535
        %537 = vmatprep.mubr.f32.mxu0 0.0
        %538 = vmatmul.mubr.f32.gmra.mrb[0].mxu0 %v414
        %v539 = vpop.f32.mrb[0].mxu0
        %v540 = vadd.f32 %v343, %v539
        %v541 = vpop.f32.mrb[0].mxu0
        %v542 = vadd.f32 %v343, %v541
        %543 = vmatprep.mubr.f32.mxu0 0.0
        %544 = vmatmul.mubr.f32.gmra.mrb[0].mxu0 %v417
        %v545 = vpop.f32.mrb[0].mxu0
        %v546 = vadd.f32 %v348, %v545
        %v547 = vpop.f32.mrb[0].mxu0
        %v548 = vadd.f32 %v348, %v547
        %549 = vmatprep.mubr.f32.mxu0 0.0
        %550 = vmatmul.mubr.f32.gmra.mrb[0].mxu0 %v420
        %v551 = vpop.f32.mrb[0].mxu0
        %v552 = vadd.f32 %v353, %v551
        %v553 = vpop.f32.mrb[0].mxu0
        %v554 = vadd.f32 %v353, %v553
        %555 = vmatprep.mubr.f32.mxu0 0.0
        %556 = vmatmul.mubr.f32.gmra.mrb[0].mxu0 %v423
        %v557 = vpop.f32.mrb[0].mxu0
        %v558 = vadd.f32 %v358, %v557
        %v559 = vpop.f32.mrb[0].mxu0
        %v560 = vadd.f32 %v358, %v559
        %561 = vmatprep.mubr.f32.mxu0 0.0
        %562 = vmatmul.mubr.f32.gmra.mrb[0].mxu0 %v426
        %v563 = vpop.f32.mrb[0].mxu0
        %v564 = vadd.f32 %v363, %v563
        %v565 = vpop.f32.mrb[0].mxu0
        %v566 = vadd.f32 %v363, %v565
        %567 = vmatprep.mubr.f32.mxu0 0.0
        %568 = vmatmul.mubr.f32.gmra.mrb[0].mxu0 %v429
        %v569 = vpop.f32.mrb[0].mxu0
        %v570 = vadd.f32 %v368, %v569
        %v571 = vpop.f32.mrb[0].mxu0
        %v572 = vadd.f32 %v368, %v571
        %573 = vmatprep.mubr.f32.mxu0 0.0
        %574 = vmatmul.mubr.f32.gmra.mrb[0].mxu0 %v432
        %v575 = vpop.f32.mrb[0].mxu0
        %v576 = vadd.f32 %v373, %v575
        %v577 = vpop.f32.mrb[0].mxu0
        %v578 = vadd.f32 %v373, %v577
        %579 = vmatprep.mubr.f32.mxu0 0.0
        %580 = vmatmul.mubr.f32.gmra.mrb[0].mxu0 %v435
        %v581 = vpop.f32.mrb[0].mxu0
        %v582 = vadd.f32 %v378, %v581
        %v583 = vpop.f32.mrb[0].mxu0
        %v584 = vadd.f32 %v378, %v583
        %585 = vmatprep.mubr.f32.mxu0 0.0
        %586 = vmatmul.mubr.f32.gmra.mrb[0].mxu0 %v438
        %v587 = vpop.f32.mrb[0].mxu0
        %v588 = vadd.f32 %v383, %v587
        %v589 = vpop.f32.mrb[0].mxu0
        %v590 = vadd.f32 %v383, %v589
        %591 = vmatprep.mubr.f32.mxu0 0.0
        %592 = vmatmul.mubr.f32.gmra.mrb[0].mxu0 %v441
        %v593 = vpop.f32.mrb[0].mxu0
        %v594 = vadd.f32 %v388, %v593
        %v595 = vpop.f32.mrb[0].mxu0
        %v596 = vadd.f32 %v388, %v595
        %597 = vmatprep.mubr.f32.mxu0 0.0
        %598 = vmatmul.mubr.f32.gmra.mrb[0].mxu0 %v444
        %v599 = vpop.f32.mrb[0].mxu0
        %v600 = vadd.f32 %v393, %v599
        %v601 = vpop.f32.mrb[0].mxu0
        %v602 = vadd.f32 %v393, %v601
        %603 = vmatprep.mubr.f32.mxu0 0.0
        %604 = vmatmul.mubr.f32.gmra.mrb[0].mxu0 %v447
        %v605 = vpop.f32.mrb[0].mxu0
        %v606 = vadd.f32 %v398, %v605
        %v607 = vpop.f32.mrb[0].mxu0
        %v608 = vadd.f32 %v398, %v607
        %609 = vdwg.mxu0
        %v610 = vmax.f32 %v516, 0.0
        %v611 = vmax.f32 %v518, 0.0
        %v612 = vmax.f32 %v522, 0.0
        %v613 = vmax.f32 %v524, 0.0
        %v614 = vmax.f32 %v528, 0.0
        %v615 = vmax.f32 %v530, 0.0
        %v616 = vmax.f32 %v534, 0.0
        %v617 = vmax.f32 %v536, 0.0
        %v618 = vmax.f32 %v540, 0.0
        %v619 = vmax.f32 %v542, 0.0
        %v620 = vmax.f32 %v546, 0.0
        %v621 = vmax.f32 %v548, 0.0
        %v622 = vmax.f32 %v552, 0.0
        %v623 = vmax.f32 %v554, 0.0
        %v624 = vmax.f32 %v558, 0.0
        %v625 = vmax.f32 %v560, 0.0
        %v626 = vmax.f32 %v564, 0.0
        %v627 = vmax.f32 %v566, 0.0
        %v628 = vmax.f32 %v570, 0.0
        %v629 = vmax.f32 %v572, 0.0
        %v630 = vmax.f32 %v576, 0.0
        %v631 = vmax.f32 %v578, 0.0
        %v632 = vmax.f32 %v582, 0.0
        %v633 = vmax.f32 %v584, 0.0
        %v634 = vmax.f32 %v588, 0.0
        %v635 = vmax.f32 %v590, 0.0
        %v636 = vmax.f32 %v594, 0.0
        %v637 = vmax.f32 %v596, 0.0
        %v638 = vmax.f32 %v600, 0.0
        %v639 = vmax.f32 %v602, 0.0
        %v640 = vmax.f32 %v606, 0.0
        %v641 = vmax.f32 %v608, 0.0
        %v642 = vlaneseq
        %v643 = vand.u32 %v642, 127
        %v644 = vadd.s32 %v643, 128
        %s645 = smul.u32 %s43, 9
        %s646 = sld [smem:[#allocation8 + %s645]]
        %s647 = sadd.s32 %s645, 1
        %s648 = sld [smem:[#allocation8 + %s647]]
        %v649 = vstv %s646
        %vm650 = vcmp.ge.s32.totalorder %v643, %v649
        %vm651 = vcmp.ge.s32.totalorder %v644, %v649
        %v652 = vstv %s648
        %vm653 = vcmp.lt.s32.totalorder %v643, %v652
        %vm654 = vcmp.lt.s32.totalorder %v644, %v652
        %vm655 = vmand %vm650, %vm653
        %vm656 = vmand %vm651, %vm654
        %v657 = vsel %vm655, 1, 0
        %v658 = vsel %vm656, 1, 0
        %vm659 = vcmp.eq.s32.totalorder %v657, 1
        %vm660 = vcmp.eq.s32.totalorder %v658, 1
        %v661 = vsel %vm659, %v610, 0.0
        %v662 = vsel %vm660, %v611, 0.0
        %v663 = vsel %vm659, %v612, 0.0
        %v664 = vsel %vm660, %v613, 0.0
        %v665 = vsel %vm659, %v614, 0.0
        %v666 = vsel %vm660, %v615, 0.0
        %v667 = vsel %vm659, %v616, 0.0
        %v668 = vsel %vm660, %v617, 0.0
        %v669 = vsel %vm659, %v618, 0.0
        %v670 = vsel %vm660, %v619, 0.0
        %v671 = vsel %vm659, %v620, 0.0
        %v672 = vsel %vm660, %v621, 0.0
        %v673 = vsel %vm659, %v622, 0.0
        %v674 = vsel %vm660, %v623, 0.0
        %v675 = vsel %vm659, %v624, 0.0
        %v676 = vsel %vm660, %v625, 0.0
        %v677 = vsel %vm659, %v626, 0.0
        %v678 = vsel %vm660, %v627, 0.0
        %v679 = vsel %vm659, %v628, 0.0
        %v680 = vsel %vm660, %v629, 0.0
        %v681 = vsel %vm659, %v630, 0.0
        %v682 = vsel %vm660, %v631, 0.0
        %v683 = vsel %vm659, %v632, 0.0
        %v684 = vsel %vm660, %v633, 0.0
        %v685 = vsel %vm659, %v634, 0.0
        %v686 = vsel %vm660, %v635, 0.0
        %v687 = vsel %vm659, %v636, 0.0
        %v688 = vsel %vm660, %v637, 0.0
        %v689 = vsel %vm659, %v638, 0.0
        %v690 = vsel %vm660, %v639, 0.0
        %v691 = vsel %vm659, %v640, 0.0
        %v692 = vsel %vm660, %v641, 0.0
        %v693 = vmax.f32 %v661, %v662
        %694 = vmax.xlane.f32.xlu0 %v693
        %v695 = vpop.xlane.xlu0 %694
        %v696 = vmax.f32 %v663, %v664
        %697 = vmax.xlane.f32.xlu0 %v696
        %v698 = vpop.xlane.xlu0 %697
        %v699 = vmax.f32 %v665, %v666
        %700 = vmax.xlane.f32.xlu0 %v699
        %v701 = vpop.xlane.xlu0 %700
        %v702 = vmax.f32 %v667, %v668
        %703 = vmax.xlane.f32.xlu0 %v702
        %v704 = vpop.xlane.xlu0 %703
        %v705 = vmax.f32 %v669, %v670
        %706 = vmax.xlane.f32.xlu0 %v705
        %v707 = vpop.xlane.xlu0 %706
        %v708 = vmax.f32 %v671, %v672
        %709 = vmax.xlane.f32.xlu0 %v708
        %v710 = vpop.xlane.xlu0 %709
        %v711 = vmax.f32 %v673, %v674
        %712 = vmax.xlane.f32.xlu0 %v711
        %v713 = vpop.xlane.xlu0 %712
        %v714 = vmax.f32 %v675, %v676
        %715 = vmax.xlane.f32.xlu0 %v714
        %v716 = vpop.xlane.xlu0 %715
        %v717 = vmax.f32 %v677, %v678
        %718 = vmax.xlane.f32.xlu0 %v717
        %v719 = vpop.xlane.xlu0 %718
        %v720 = vmax.f32 %v679, %v680
        %721 = vmax.xlane.f32.xlu0 %v720
        %v722 = vpop.xlane.xlu0 %721
        %v723 = vmax.f32 %v681, %v682
        %724 = vmax.xlane.f32.xlu0 %v723
        %v725 = vpop.xlane.xlu0 %724
        %v726 = vmax.f32 %v683, %v684
        %727 = vmax.xlane.f32.xlu0 %v726
        %v728 = vpop.xlane.xlu0 %727
        %v729 = vmax.f32 %v685, %v686
        %730 = vmax.xlane.f32.xlu0 %v729
        %v731 = vpop.xlane.xlu0 %730
        %v732 = vmax.f32 %v687, %v688
        %733 = vmax.xlane.f32.xlu0 %v732
        %v734 = vpop.xlane.xlu0 %733
        %v735 = vmax.f32 %v689, %v690
        %736 = vmax.xlane.f32.xlu0 %v735
        %v737 = vpop.xlane.xlu0 %736
        %v738 = vmax.f32 %v691, %v692
        %739 = vmax.xlane.f32.xlu0 %v738
        %v740 = vpop.xlane.xlu0 %739
        %s741 = sadd.s32 %s645, 2
        %s742 = sld [smem:[#allocation8 + %s741]]
        %vm743 = vcmp.ge.s32.totalorder %v643, %v652
        %vm744 = vcmp.ge.s32.totalorder %v644, %v652
        %v745 = vstv %s742
        %vm746 = vcmp.lt.s32.totalorder %v643, %v745
        %vm747 = vcmp.lt.s32.totalorder %v644, %v745
        %vm748 = vmand %vm743, %vm746
        %vm749 = vmand %vm744, %vm747
        %v750 = vsel %vm748, 1, 0
        %v751 = vsel %vm749, 1, 0
        %vm752 = vcmp.eq.s32.totalorder %v750, 1
        %vm753 = vcmp.eq.s32.totalorder %v751, 1
        %v754 = vsel %vm752, %v610, 0.0
        %v755 = vsel %vm753, %v611, 0.0
        %v756 = vsel %vm752, %v612, 0.0
        %v757 = vsel %vm753, %v613, 0.0
        %v758 = vsel %vm752, %v614, 0.0
        %v759 = vsel %vm753, %v615, 0.0
        %v760 = vsel %vm752, %v616, 0.0
        %v761 = vsel %vm753, %v617, 0.0
        %v762 = vsel %vm752, %v618, 0.0
        %v763 = vsel %vm753, %v619, 0.0
        %v764 = vsel %vm752, %v620, 0.0
        %v765 = vsel %vm753, %v621, 0.0
        %v766 = vsel %vm752, %v622, 0.0
        %v767 = vsel %vm753, %v623, 0.0
        %v768 = vsel %vm752, %v624, 0.0
        %v769 = vsel %vm753, %v625, 0.0
        %v770 = vsel %vm752, %v626, 0.0
        %v771 = vsel %vm753, %v627, 0.0
        %v772 = vsel %vm752, %v628, 0.0
        %v773 = vsel %vm753, %v629, 0.0
        %v774 = vsel %vm752, %v630, 0.0
        %v775 = vsel %vm753, %v631, 0.0
        %v776 = vsel %vm752, %v632, 0.0
        %v777 = vsel %vm753, %v633, 0.0
        %v778 = vsel %vm752, %v634, 0.0
        %v779 = vsel %vm753, %v635, 0.0
        %v780 = vsel %vm752, %v636, 0.0
        %v781 = vsel %vm753, %v637, 0.0
        %v782 = vsel %vm752, %v638, 0.0
        %v783 = vsel %vm753, %v639, 0.0
        %v784 = vsel %vm752, %v640, 0.0
        %v785 = vsel %vm753, %v641, 0.0
        %v786 = vmax.f32 %v754, %v755
        %787 = vmax.xlane.f32.xlu0 %v786
        %v788 = vpop.xlane.xlu0 %787
        %v789 = vmax.f32 %v756, %v757
        %790 = vmax.xlane.f32.xlu0 %v789
        %v791 = vpop.xlane.xlu0 %790
        %v792 = vmax.f32 %v758, %v759
        %793 = vmax.xlane.f32.xlu0 %v792
        %v794 = vpop.xlane.xlu0 %793
        %v795 = vmax.f32 %v760, %v761
        %796 = vmax.xlane.f32.xlu0 %v795
        %v797 = vpop.xlane.xlu0 %796
        %v798 = vmax.f32 %v762, %v763
        %799 = vmax.xlane.f32.xlu0 %v798
        %v800 = vpop.xlane.xlu0 %799
        %v801 = vmax.f32 %v764, %v765
        %802 = vmax.xlane.f32.xlu0 %v801
        %v803 = vpop.xlane.xlu0 %802
        %v804 = vmax.f32 %v766, %v767
        %805 = vmax.xlane.f32.xlu0 %v804
        %v806 = vpop.xlane.xlu0 %805
        %v807 = vmax.f32 %v768, %v769
        %808 = vmax.xlane.f32.xlu0 %v807
        %v809 = vpop.xlane.xlu0 %808
        %v810 = vmax.f32 %v770, %v771
        %811 = vmax.xlane.f32.xlu0 %v810
        %v812 = vpop.xlane.xlu0 %811
        %v813 = vmax.f32 %v772, %v773
        %814 = vmax.xlane.f32.xlu0 %v813
        %v815 = vpop.xlane.xlu0 %814
        %v816 = vmax.f32 %v774, %v775
        %817 = vmax.xlane.f32.xlu0 %v816
        %v818 = vpop.xlane.xlu0 %817
        %v819 = vmax.f32 %v776, %v777
        %820 = vmax.xlane.f32.xlu0 %v819
        %v821 = vpop.xlane.xlu0 %820
        %v822 = vmax.f32 %v778, %v779
        %823 = vmax.xlane.f32.xlu0 %v822
        %v824 = vpop.xlane.xlu0 %823
        %v825 = vmax.f32 %v780, %v781
        %826 = vmax.xlane.f32.xlu0 %v825
        %v827 = vpop.xlane.xlu0 %826
        %v828 = vmax.f32 %v782, %v783
        %829 = vmax.xlane.f32.xlu0 %v828
        %v830 = vpop.xlane.xlu0 %829
        %v831 = vmax.f32 %v784, %v785
        %832 = vmax.xlane.f32.xlu0 %v831
        %v833 = vpop.xlane.xlu0 %832
        %s834 = sadd.s32 %s645, 3
        %s835 = sld [smem:[#allocation8 + %s834]]
        %vm836 = vcmp.ge.s32.totalorder %v643, %v745
        %vm837 = vcmp.ge.s32.totalorder %v644, %v745
        %v838 = vstv %s835
        %vm839 = vcmp.lt.s32.totalorder %v643, %v838
        %vm840 = vcmp.lt.s32.totalorder %v644, %v838
        %vm841 = vmand %vm836, %vm839
        %vm842 = vmand %vm837, %vm840
        %v843 = vsel %vm841, 1, 0
        %v844 = vsel %vm842, 1, 0
        %vm845 = vcmp.eq.s32.totalorder %v843, 1
        %vm846 = vcmp.eq.s32.totalorder %v844, 1
        %v847 = vsel %vm845, %v610, 0.0
        %v848 = vsel %vm846, %v611, 0.0
        %v849 = vsel %vm845, %v612, 0.0
        %v850 = vsel %vm846, %v613, 0.0
        %v851 = vsel %vm845, %v614, 0.0
        %v852 = vsel %vm846, %v615, 0.0
        %v853 = vsel %vm845, %v616, 0.0
        %v854 = vsel %vm846, %v617, 0.0
        %v855 = vsel %vm845, %v618, 0.0
        %v856 = vsel %vm846, %v619, 0.0
        %v857 = vsel %vm845, %v620, 0.0
        %v858 = vsel %vm846, %v621, 0.0
        %v859 = vsel %vm845, %v622, 0.0
        %v860 = vsel %vm846, %v623, 0.0
        %v861 = vsel %vm845, %v624, 0.0
        %v862 = vsel %vm846, %v625, 0.0
        %v863 = vsel %vm845, %v626, 0.0
        %v864 = vsel %vm846, %v627, 0.0
        %v865 = vsel %vm845, %v628, 0.0
        %v866 = vsel %vm846, %v629, 0.0
        %v867 = vsel %vm845, %v630, 0.0
        %v868 = vsel %vm846, %v631, 0.0
        %v869 = vsel %vm845, %v632, 0.0
        %v870 = vsel %vm846, %v633, 0.0
        %v871 = vsel %vm845, %v634, 0.0
        %v872 = vsel %vm846, %v635, 0.0
        %v873 = vsel %vm845, %v636, 0.0
        %v874 = vsel %vm846, %v637, 0.0
        %v875 = vsel %vm845, %v638, 0.0
        %v876 = vsel %vm846, %v639, 0.0
        %v877 = vsel %vm845, %v640, 0.0
        %v878 = vsel %vm846, %v641, 0.0
        %v879 = vmax.f32 %v847, %v848
        %880 = vmax.xlane.f32.xlu0 %v879
        %v881 = vpop.xlane.xlu0 %880
        %v882 = vmax.f32 %v849, %v850
        %883 = vmax.xlane.f32.xlu0 %v882
        %v884 = vpop.xlane.xlu0 %883
        %v885 = vmax.f32 %v851, %v852
        %886 = vmax.xlane.f32.xlu0 %v885
        %v887 = vpop.xlane.xlu0 %886
        %v888 = vmax.f32 %v853, %v854
        %889 = vmax.xlane.f32.xlu0 %v888
        %v890 = vpop.xlane.xlu0 %889
        %v891 = vmax.f32 %v855, %v856
        %892 = vmax.xlane.f32.xlu0 %v891
        %v893 = vpop.xlane.xlu0 %892
        %v894 = vmax.f32 %v857, %v858
        %895 = vmax.xlane.f32.xlu0 %v894
        %v896 = vpop.xlane.xlu0 %895
        %v897 = vmax.f32 %v859, %v860
        %898 = vmax.xlane.f32.xlu0 %v897
        %v899 = vpop.xlane.xlu0 %898
        %v900 = vmax.f32 %v861, %v862
        %901 = vmax.xlane.f32.xlu0 %v900
        %v902 = vpop.xlane.xlu0 %901
        %v903 = vmax.f32 %v863, %v864
        %904 = vmax.xlane.f32.xlu0 %v903
        %v905 = vpop.xlane.xlu0 %904
        %v906 = vmax.f32 %v865, %v866
        %907 = vmax.xlane.f32.xlu0 %v906
        %v908 = vpop.xlane.xlu0 %907
        %v909 = vmax.f32 %v867, %v868
        %910 = vmax.xlane.f32.xlu0 %v909
        %v911 = vpop.xlane.xlu0 %910
        %v912 = vmax.f32 %v869, %v870
        %913 = vmax.xlane.f32.xlu0 %v912
        %v914 = vpop.xlane.xlu0 %913
        %v915 = vmax.f32 %v871, %v872
        %916 = vmax.xlane.f32.xlu0 %v915
        %v917 = vpop.xlane.xlu0 %916
        %v918 = vmax.f32 %v873, %v874
        %919 = vmax.xlane.f32.xlu0 %v918
        %v920 = vpop.xlane.xlu0 %919
        %v921 = vmax.f32 %v875, %v876
        %922 = vmax.xlane.f32.xlu0 %v921
        %v923 = vpop.xlane.xlu0 %922
        %v924 = vmax.f32 %v877, %v878
        %925 = vmax.xlane.f32.xlu0 %v924
        %v926 = vpop.xlane.xlu0 %925
        %s927 = sadd.s32 %s645, 4
        %s928 = sld [smem:[#allocation8 + %s927]]
        %vm929 = vcmp.ge.s32.totalorder %v643, %v838
        %vm930 = vcmp.ge.s32.totalorder %v644, %v838
        %v931 = vstv %s928
        %vm932 = vcmp.lt.s32.totalorder %v643, %v931
        %vm933 = vcmp.lt.s32.totalorder %v644, %v931
        %vm934 = vmand %vm929, %vm932
        %vm935 = vmand %vm930, %vm933
        %v936 = vsel %vm934, 1, 0
        %v937 = vsel %vm935, 1, 0
        %vm938 = vcmp.eq.s32.totalorder %v936, 1
        %vm939 = vcmp.eq.s32.totalorder %v937, 1
        %v940 = vsel %vm938, %v610, 0.0
        %v941 = vsel %vm939, %v611, 0.0
        %v942 = vsel %vm938, %v612, 0.0
        %v943 = vsel %vm939, %v613, 0.0
        %v944 = vsel %vm938, %v614, 0.0
        %v945 = vsel %vm939, %v615, 0.0
        %v946 = vsel %vm938, %v616, 0.0
        %v947 = vsel %vm939, %v617, 0.0
        %v948 = vsel %vm938, %v618, 0.0
        %v949 = vsel %vm939, %v619, 0.0
        %v950 = vsel %vm938, %v620, 0.0
        %v951 = vsel %vm939, %v621, 0.0
        %v952 = vsel %vm938, %v622, 0.0
        %v953 = vsel %vm939, %v623, 0.0
        %v954 = vsel %vm938, %v624, 0.0
        %v955 = vsel %vm939, %v625, 0.0
        %v956 = vsel %vm938, %v626, 0.0
        %v957 = vsel %vm939, %v627, 0.0
        %v958 = vsel %vm938, %v628, 0.0
        %v959 = vsel %vm939, %v629, 0.0
        %v960 = vsel %vm938, %v630, 0.0
        %v961 = vsel %vm939, %v631, 0.0
        %v962 = vsel %vm938, %v632, 0.0
        %v963 = vsel %vm939, %v633, 0.0
        %v964 = vsel %vm938, %v634, 0.0
        %v965 = vsel %vm939, %v635, 0.0
        %v966 = vsel %vm938, %v636, 0.0
        %v967 = vsel %vm939, %v637, 0.0
        %v968 = vsel %vm938, %v638, 0.0
        %v969 = vsel %vm939, %v639, 0.0
        %v970 = vsel %vm938, %v640, 0.0
        %v971 = vsel %vm939, %v641, 0.0
        %v972 = vmax.f32 %v940, %v941
        %973 = vmax.xlane.f32.xlu0 %v972
        %v974 = vpop.xlane.xlu0 %973
        %v975 = vmax.f32 %v942, %v943
        %976 = vmax.xlane.f32.xlu0 %v975
        %v977 = vpop.xlane.xlu0 %976
        %v978 = vmax.f32 %v944, %v945
        %979 = vmax.xlane.f32.xlu0 %v978
        %v980 = vpop.xlane.xlu0 %979
        %v981 = vmax.f32 %v946, %v947
        %982 = vmax.xlane.f32.xlu0 %v981
        %v983 = vpop.xlane.xlu0 %982
        %v984 = vmax.f32 %v948, %v949
        %985 = vmax.xlane.f32.xlu0 %v984
        %v986 = vpop.xlane.xlu0 %985
        %v987 = vmax.f32 %v950, %v951
        %988 = vmax.xlane.f32.xlu0 %v987
        %v989 = vpop.xlane.xlu0 %988
        %v990 = vmax.f32 %v952, %v953
        %991 = vmax.xlane.f32.xlu0 %v990
        %v992 = vpop.xlane.xlu0 %991
        %v993 = vmax.f32 %v954, %v955
        %994 = vmax.xlane.f32.xlu0 %v993
        %v995 = vpop.xlane.xlu0 %994
        %v996 = vmax.f32 %v956, %v957
        %997 = vmax.xlane.f32.xlu0 %v996
        %v998 = vpop.xlane.xlu0 %997
        %v999 = vmax.f32 %v958, %v959
        %1000 = vmax.xlane.f32.xlu0 %v999
        %v1001 = vpop.xlane.xlu0 %1000
        %v1002 = vmax.f32 %v960, %v961
        %1003 = vmax.xlane.f32.xlu0 %v1002
        %v1004 = vpop.xlane.xlu0 %1003
        %v1005 = vmax.f32 %v962, %v963
        %1006 = vmax.xlane.f32.xlu0 %v1005
        %v1007 = vpop.xlane.xlu0 %1006
        %v1008 = vmax.f32 %v964, %v965
        %1009 = vmax.xlane.f32.xlu0 %v1008
        %v1010 = vpop.xlane.xlu0 %1009
        %v1011 = vmax.f32 %v966, %v967
        %1012 = vmax.xlane.f32.xlu0 %v1011
        %v1013 = vpop.xlane.xlu0 %1012
        %v1014 = vmax.f32 %v968, %v969
        %1015 = vmax.xlane.f32.xlu0 %v1014
        %v1016 = vpop.xlane.xlu0 %1015
        %v1017 = vmax.f32 %v970, %v971
        %1018 = vmax.xlane.f32.xlu0 %v1017
        %v1019 = vpop.xlane.xlu0 %1018
        %s1020 = sadd.s32 %s645, 5
        %s1021 = sld [smem:[#allocation8 + %s1020]]
        %vm1022 = vcmp.ge.s32.totalorder %v643, %v931
        %vm1023 = vcmp.ge.s32.totalorder %v644, %v931
        %v1024 = vstv %s1021
        %vm1025 = vcmp.lt.s32.totalorder %v643, %v1024
        %vm1026 = vcmp.lt.s32.totalorder %v644, %v1024
        %vm1027 = vmand %vm1022, %vm1025
        %vm1028 = vmand %vm1023, %vm1026
        %v1029 = vsel %vm1027, 1, 0
        %v1030 = vsel %vm1028, 1, 0
        %vm1031 = vcmp.eq.s32.totalorder %v1029, 1
        %vm1032 = vcmp.eq.s32.totalorder %v1030, 1
        %v1033 = vsel %vm1031, %v610, 0.0
        %v1034 = vsel %vm1032, %v611, 0.0
        %v1035 = vsel %vm1031, %v612, 0.0
        %v1036 = vsel %vm1032, %v613, 0.0
        %v1037 = vsel %vm1031, %v614, 0.0
        %v1038 = vsel %vm1032, %v615, 0.0
        %v1039 = vsel %vm1031, %v616, 0.0
        %v1040 = vsel %vm1032, %v617, 0.0
        %v1041 = vsel %vm1031, %v618, 0.0
        %v1042 = vsel %vm1032, %v619, 0.0
        %v1043 = vsel %vm1031, %v620, 0.0
        %v1044 = vsel %vm1032, %v621, 0.0
        %v1045 = vsel %vm1031, %v622, 0.0
        %v1046 = vsel %vm1032, %v623, 0.0
        %v1047 = vsel %vm1031, %v624, 0.0
        %v1048 = vsel %vm1032, %v625, 0.0
        %v1049 = vsel %vm1031, %v626, 0.0
        %v1050 = vsel %vm1032, %v627, 0.0
        %v1051 = vsel %vm1031, %v628, 0.0
        %v1052 = vsel %vm1032, %v629, 0.0
        %v1053 = vsel %vm1031, %v630, 0.0
        %v1054 = vsel %vm1032, %v631, 0.0
        %v1055 = vsel %vm1031, %v632, 0.0
        %v1056 = vsel %vm1032, %v633, 0.0
        %v1057 = vsel %vm1031, %v634, 0.0
        %v1058 = vsel %vm1032, %v635, 0.0
        %v1059 = vsel %vm1031, %v636, 0.0
        %v1060 = vsel %vm1032, %v637, 0.0
        %v1061 = vsel %vm1031, %v638, 0.0
        %v1062 = vsel %vm1032, %v639, 0.0
        %v1063 = vsel %vm1031, %v640, 0.0
        %v1064 = vsel %vm1032, %v641, 0.0
        %v1065 = vmax.f32 %v1033, %v1034
        %1066 = vmax.xlane.f32.xlu0 %v1065
        %v1067 = vpop.xlane.xlu0 %1066
        %v1068 = vmax.f32 %v1035, %v1036
        %1069 = vmax.xlane.f32.xlu0 %v1068
        %v1070 = vpop.xlane.xlu0 %1069
        %v1071 = vmax.f32 %v1037, %v1038
        %1072 = vmax.xlane.f32.xlu0 %v1071
        %v1073 = vpop.xlane.xlu0 %1072
        %v1074 = vmax.f32 %v1039, %v1040
        %1075 = vmax.xlane.f32.xlu0 %v1074
        %v1076 = vpop.xlane.xlu0 %1075
        %v1077 = vmax.f32 %v1041, %v1042
        %1078 = vmax.xlane.f32.xlu0 %v1077
        %v1079 = vpop.xlane.xlu0 %1078
        %v1080 = vmax.f32 %v1043, %v1044
        %1081 = vmax.xlane.f32.xlu0 %v1080
        %v1082 = vpop.xlane.xlu0 %1081
        %v1083 = vmax.f32 %v1045, %v1046
        %1084 = vmax.xlane.f32.xlu0 %v1083
        %v1085 = vpop.xlane.xlu0 %1084
        %v1086 = vmax.f32 %v1047, %v1048
        %1087 = vmax.xlane.f32.xlu0 %v1086
        %v1088 = vpop.xlane.xlu0 %1087
        %v1089 = vmax.f32 %v1049, %v1050
        %1090 = vmax.xlane.f32.xlu0 %v1089
        %v1091 = vpop.xlane.xlu0 %1090
        %v1092 = vmax.f32 %v1051, %v1052
        %1093 = vmax.xlane.f32.xlu0 %v1092
        %v1094 = vpop.xlane.xlu0 %1093
        %v1095 = vmax.f32 %v1053, %v1054
        %1096 = vmax.xlane.f32.xlu0 %v1095
        %v1097 = vpop.xlane.xlu0 %1096
        %v1098 = vmax.f32 %v1055, %v1056
        %1099 = vmax.xlane.f32.xlu0 %v1098
        %v1100 = vpop.xlane.xlu0 %1099
        %v1101 = vmax.f32 %v1057, %v1058
        %1102 = vmax.xlane.f32.xlu0 %v1101
        %v1103 = vpop.xlane.xlu0 %1102
        %v1104 = vmax.f32 %v1059, %v1060
        %1105 = vmax.xlane.f32.xlu0 %v1104
        %v1106 = vpop.xlane.xlu0 %1105
        %v1107 = vmax.f32 %v1061, %v1062
        %1108 = vmax.xlane.f32.xlu0 %v1107
        %v1109 = vpop.xlane.xlu0 %1108
        %v1110 = vmax.f32 %v1063, %v1064
        %1111 = vmax.xlane.f32.xlu0 %v1110
        %v1112 = vpop.xlane.xlu0 %1111
        %s1113 = sadd.s32 %s645, 6
        %s1114 = sld [smem:[#allocation8 + %s1113]]
        %vm1115 = vcmp.ge.s32.totalorder %v643, %v1024
        %vm1116 = vcmp.ge.s32.totalorder %v644, %v1024
        %v1117 = vstv %s1114
        %vm1118 = vcmp.lt.s32.totalorder %v643, %v1117
        %vm1119 = vcmp.lt.s32.totalorder %v644, %v1117
        %vm1120 = vmand %vm1115, %vm1118
        %vm1121 = vmand %vm1116, %vm1119
        %v1122 = vsel %vm1120, 1, 0
        %v1123 = vsel %vm1121, 1, 0
        %vm1124 = vcmp.eq.s32.totalorder %v1122, 1
        %vm1125 = vcmp.eq.s32.totalorder %v1123, 1
        %v1126 = vsel %vm1124, %v610, 0.0
        %v1127 = vsel %vm1125, %v611, 0.0
        %v1128 = vsel %vm1124, %v612, 0.0
        %v1129 = vsel %vm1125, %v613, 0.0
        %v1130 = vsel %vm1124, %v614, 0.0
        %v1131 = vsel %vm1125, %v615, 0.0
        %v1132 = vsel %vm1124, %v616, 0.0
        %v1133 = vsel %vm1125, %v617, 0.0
        %v1134 = vsel %vm1124, %v618, 0.0
        %v1135 = vsel %vm1125, %v619, 0.0
        %v1136 = vsel %vm1124, %v620, 0.0
        %v1137 = vsel %vm1125, %v621, 0.0
        %v1138 = vsel %vm1124, %v622, 0.0
        %v1139 = vsel %vm1125, %v623, 0.0
        %v1140 = vsel %vm1124, %v624, 0.0
        %v1141 = vsel %vm1125, %v625, 0.0
        %v1142 = vsel %vm1124, %v626, 0.0
        %v1143 = vsel %vm1125, %v627, 0.0
        %v1144 = vsel %vm1124, %v628, 0.0
        %v1145 = vsel %vm1125, %v629, 0.0
        %v1146 = vsel %vm1124, %v630, 0.0
        %v1147 = vsel %vm1125, %v631, 0.0
        %v1148 = vsel %vm1124, %v632, 0.0
        %v1149 = vsel %vm1125, %v633, 0.0
        %v1150 = vsel %vm1124, %v634, 0.0
        %v1151 = vsel %vm1125, %v635, 0.0
        %v1152 = vsel %vm1124, %v636, 0.0
        %v1153 = vsel %vm1125, %v637, 0.0
        %v1154 = vsel %vm1124, %v638, 0.0
        %v1155 = vsel %vm1125, %v639, 0.0
        %v1156 = vsel %vm1124, %v640, 0.0
        %v1157 = vsel %vm1125, %v641, 0.0
        %v1158 = vmax.f32 %v1126, %v1127
        %1159 = vmax.xlane.f32.xlu0 %v1158
        %v1160 = vpop.xlane.xlu0 %1159
        %v1161 = vmax.f32 %v1128, %v1129
        %1162 = vmax.xlane.f32.xlu0 %v1161
        %v1163 = vpop.xlane.xlu0 %1162
        %v1164 = vmax.f32 %v1130, %v1131
        %1165 = vmax.xlane.f32.xlu0 %v1164
        %v1166 = vpop.xlane.xlu0 %1165
        %v1167 = vmax.f32 %v1132, %v1133
        %1168 = vmax.xlane.f32.xlu0 %v1167
        %v1169 = vpop.xlane.xlu0 %1168
        %v1170 = vmax.f32 %v1134, %v1135
        %1171 = vmax.xlane.f32.xlu0 %v1170
        %v1172 = vpop.xlane.xlu0 %1171
        %v1173 = vmax.f32 %v1136, %v1137
        %1174 = vmax.xlane.f32.xlu0 %v1173
        %v1175 = vpop.xlane.xlu0 %1174
        %v1176 = vmax.f32 %v1138, %v1139
        %1177 = vmax.xlane.f32.xlu0 %v1176
        %v1178 = vpop.xlane.xlu0 %1177
        %v1179 = vmax.f32 %v1140, %v1141
        %1180 = vmax.xlane.f32.xlu0 %v1179
        %v1181 = vpop.xlane.xlu0 %1180
        %v1182 = vmax.f32 %v1142, %v1143
        %1183 = vmax.xlane.f32.xlu0 %v1182
        %v1184 = vpop.xlane.xlu0 %1183
        %v1185 = vmax.f32 %v1144, %v1145
        %1186 = vmax.xlane.f32.xlu0 %v1185
        %v1187 = vpop.xlane.xlu0 %1186
        %v1188 = vmax.f32 %v1146, %v1147
        %1189 = vmax.xlane.f32.xlu0 %v1188
        %v1190 = vpop.xlane.xlu0 %1189
        %v1191 = vmax.f32 %v1148, %v1149
        %1192 = vmax.xlane.f32.xlu0 %v1191
        %v1193 = vpop.xlane.xlu0 %1192
        %v1194 = vmax.f32 %v1150, %v1151
        %1195 = vmax.xlane.f32.xlu0 %v1194
        %v1196 = vpop.xlane.xlu0 %1195
        %v1197 = vmax.f32 %v1152, %v1153
        %1198 = vmax.xlane.f32.xlu0 %v1197
        %v1199 = vpop.xlane.xlu0 %1198
        %v1200 = vmax.f32 %v1154, %v1155
        %1201 = vmax.xlane.f32.xlu0 %v1200
        %v1202 = vpop.xlane.xlu0 %1201
        %v1203 = vmax.f32 %v1156, %v1157
        %1204 = vmax.xlane.f32.xlu0 %v1203
        %v1205 = vpop.xlane.xlu0 %1204
        %s1206 = sadd.s32 %s645, 7
        %s1207 = sld [smem:[#allocation8 + %s1206]]
        %vm1208 = vcmp.ge.s32.totalorder %v643, %v1117
        %vm1209 = vcmp.ge.s32.totalorder %v644, %v1117
        %v1210 = vstv %s1207
        %vm1211 = vcmp.lt.s32.totalorder %v643, %v1210
        %vm1212 = vcmp.lt.s32.totalorder %v644, %v1210
        %vm1213 = vmand %vm1208, %vm1211
        %vm1214 = vmand %vm1209, %vm1212
        %v1215 = vsel %vm1213, 1, 0
        %v1216 = vsel %vm1214, 1, 0
        %vm1217 = vcmp.eq.s32.totalorder %v1215, 1
        %vm1218 = vcmp.eq.s32.totalorder %v1216, 1
        %v1219 = vsel %vm1217, %v610, 0.0
        %v1220 = vsel %vm1218, %v611, 0.0
        %v1221 = vsel %vm1217, %v612, 0.0
        %v1222 = vsel %vm1218, %v613, 0.0
        %v1223 = vsel %vm1217, %v614, 0.0
        %v1224 = vsel %vm1218, %v615, 0.0
        %v1225 = vsel %vm1217, %v616, 0.0
        %v1226 = vsel %vm1218, %v617, 0.0
        %v1227 = vsel %vm1217, %v618, 0.0
        %v1228 = vsel %vm1218, %v619, 0.0
        %v1229 = vsel %vm1217, %v620, 0.0
        %v1230 = vsel %vm1218, %v621, 0.0
        %v1231 = vsel %vm1217, %v622, 0.0
        %v1232 = vsel %vm1218, %v623, 0.0
        %v1233 = vsel %vm1217, %v624, 0.0
        %v1234 = vsel %vm1218, %v625, 0.0
        %v1235 = vsel %vm1217, %v626, 0.0
        %v1236 = vsel %vm1218, %v627, 0.0
        %v1237 = vsel %vm1217, %v628, 0.0
        %v1238 = vsel %vm1218, %v629, 0.0
        %v1239 = vsel %vm1217, %v630, 0.0
        %v1240 = vsel %vm1218, %v631, 0.0
        %v1241 = vsel %vm1217, %v632, 0.0
        %v1242 = vsel %vm1218, %v633, 0.0
        %v1243 = vsel %vm1217, %v634, 0.0
        %v1244 = vsel %vm1218, %v635, 0.0
        %v1245 = vsel %vm1217, %v636, 0.0
        %v1246 = vsel %vm1218, %v637, 0.0
        %v1247 = vsel %vm1217, %v638, 0.0
        %v1248 = vsel %vm1218, %v639, 0.0
        %v1249 = vsel %vm1217, %v640, 0.0
        %v1250 = vsel %vm1218, %v641, 0.0
        %v1251 = vmax.f32 %v1219, %v1220
        %1252 = vmax.xlane.f32.xlu0 %v1251
        %v1253 = vpop.xlane.xlu0 %1252
        %v1254 = vmax.f32 %v1221, %v1222
        %1255 = vmax.xlane.f32.xlu0 %v1254
        %v1256 = vpop.xlane.xlu0 %1255
        %v1257 = vmax.f32 %v1223, %v1224
        %1258 = vmax.xlane.f32.xlu0 %v1257
        %v1259 = vpop.xlane.xlu0 %1258
        %v1260 = vmax.f32 %v1225, %v1226
        %1261 = vmax.xlane.f32.xlu0 %v1260
        %v1262 = vpop.xlane.xlu0 %1261
        %v1263 = vmax.f32 %v1227, %v1228
        %1264 = vmax.xlane.f32.xlu0 %v1263
        %v1265 = vpop.xlane.xlu0 %1264
        %v1266 = vmax.f32 %v1229, %v1230
        %1267 = vmax.xlane.f32.xlu0 %v1266
        %v1268 = vpop.xlane.xlu0 %1267
        %v1269 = vmax.f32 %v1231, %v1232
        %1270 = vmax.xlane.f32.xlu0 %v1269
        %v1271 = vpop.xlane.xlu0 %1270
        %v1272 = vmax.f32 %v1233, %v1234
        %1273 = vmax.xlane.f32.xlu0 %v1272
        %v1274 = vpop.xlane.xlu0 %1273
        %v1275 = vmax.f32 %v1235, %v1236
        %1276 = vmax.xlane.f32.xlu0 %v1275
        %v1277 = vpop.xlane.xlu0 %1276
        %v1278 = vmax.f32 %v1237, %v1238
        %1279 = vmax.xlane.f32.xlu0 %v1278
        %v1280 = vpop.xlane.xlu0 %1279
        %v1281 = vmax.f32 %v1239, %v1240
        %1282 = vmax.xlane.f32.xlu0 %v1281
        %v1283 = vpop.xlane.xlu0 %1282
        %v1284 = vmax.f32 %v1241, %v1242
        %1285 = vmax.xlane.f32.xlu0 %v1284
        %v1286 = vpop.xlane.xlu0 %1285
        %v1287 = vmax.f32 %v1243, %v1244
        %1288 = vmax.xlane.f32.xlu0 %v1287
        %v1289 = vpop.xlane.xlu0 %1288
        %v1290 = vmax.f32 %v1245, %v1246
        %1291 = vmax.xlane.f32.xlu0 %v1290
        %v1292 = vpop.xlane.xlu0 %1291
        %v1293 = vmax.f32 %v1247, %v1248
        %1294 = vmax.xlane.f32.xlu0 %v1293
        %v1295 = vpop.xlane.xlu0 %1294
        %v1296 = vmax.f32 %v1249, %v1250
        %1297 = vmax.xlane.f32.xlu0 %v1296
        %v1298 = vpop.xlane.xlu0 %1297
        %s1299 = sadd.s32 %s645, 8
        %s1300 = sld [smem:[#allocation8 + %s1299]]
        %vm1301 = vcmp.ge.s32.totalorder %v643, %v1210
        %vm1302 = vcmp.ge.s32.totalorder %v644, %v1210
        %v1303 = vstv %s1300
        %vm1304 = vcmp.lt.s32.totalorder %v643, %v1303
        %vm1305 = vcmp.lt.s32.totalorder %v644, %v1303
        %vm1306 = vmand %vm1301, %vm1304
        %vm1307 = vmand %vm1302, %vm1305
        %v1308 = vsel %vm1306, 1, 0
        %v1309 = vsel %vm1307, 1, 0
        %vm1310 = vcmp.eq.s32.totalorder %v1308, 1
        %vm1311 = vcmp.eq.s32.totalorder %v1309, 1
        %v1312 = vsel %vm1310, %v610, 0.0
        %v1313 = vsel %vm1311, %v611, 0.0
        %v1314 = vsel %vm1310, %v612, 0.0
        %v1315 = vsel %vm1311, %v613, 0.0
        %v1316 = vsel %vm1310, %v614, 0.0
        %v1317 = vsel %vm1311, %v615, 0.0
        %v1318 = vsel %vm1310, %v616, 0.0
        %v1319 = vsel %vm1311, %v617, 0.0
        %v1320 = vsel %vm1310, %v618, 0.0
        %v1321 = vsel %vm1311, %v619, 0.0
        %v1322 = vsel %vm1310, %v620, 0.0
        %v1323 = vsel %vm1311, %v621, 0.0
        %v1324 = vsel %vm1310, %v622, 0.0
        %v1325 = vsel %vm1311, %v623, 0.0
        %v1326 = vsel %vm1310, %v624, 0.0
        %v1327 = vsel %vm1311, %v625, 0.0
        %v1328 = vsel %vm1310, %v626, 0.0
        %v1329 = vsel %vm1311, %v627, 0.0
        %v1330 = vsel %vm1310, %v628, 0.0
        %v1331 = vsel %vm1311, %v629, 0.0
        %v1332 = vsel %vm1310, %v630, 0.0
        %v1333 = vsel %vm1311, %v631, 0.0
        %v1334 = vsel %vm1310, %v632, 0.0
        %v1335 = vsel %vm1311, %v633, 0.0
        %v1336 = vsel %vm1310, %v634, 0.0
        %v1337 = vsel %vm1311, %v635, 0.0
        %v1338 = vsel %vm1310, %v636, 0.0
        %v1339 = vsel %vm1311, %v637, 0.0
        %v1340 = vsel %vm1310, %v638, 0.0
        %v1341 = vsel %vm1311, %v639, 0.0
        %v1342 = vsel %vm1310, %v640, 0.0
        %v1343 = vsel %vm1311, %v641, 0.0
        %v1344 = vmax.f32 %v1312, %v1313
        %1345 = vmax.xlane.f32.xlu0 %v1344
        %v1346 = vpop.xlane.xlu0 %1345
        %v1347 = vmax.f32 %v1314, %v1315
        %1348 = vmax.xlane.f32.xlu0 %v1347
        %v1349 = vpop.xlane.xlu0 %1348
        %v1350 = vmax.f32 %v1316, %v1317
        %1351 = vmax.xlane.f32.xlu0 %v1350
        %v1352 = vpop.xlane.xlu0 %1351
        %v1353 = vmax.f32 %v1318, %v1319
        %1354 = vmax.xlane.f32.xlu0 %v1353
        %v1355 = vpop.xlane.xlu0 %1354
        %v1356 = vmax.f32 %v1320, %v1321
        %1357 = vmax.xlane.f32.xlu0 %v1356
        %v1358 = vpop.xlane.xlu0 %1357
        %v1359 = vmax.f32 %v1322, %v1323
        %1360 = vmax.xlane.f32.xlu0 %v1359
        %v1361 = vpop.xlane.xlu0 %1360
        %v1362 = vmax.f32 %v1324, %v1325
        %1363 = vmax.xlane.f32.xlu0 %v1362
        %v1364 = vpop.xlane.xlu0 %1363
        %v1365 = vmax.f32 %v1326, %v1327
        %1366 = vmax.xlane.f32.xlu0 %v1365
        %v1367 = vpop.xlane.xlu0 %1366
        %v1368 = vmax.f32 %v1328, %v1329
        %1369 = vmax.xlane.f32.xlu0 %v1368
        %v1370 = vpop.xlane.xlu0 %1369
        %v1371 = vmax.f32 %v1330, %v1331
        %1372 = vmax.xlane.f32.xlu0 %v1371
        %v1373 = vpop.xlane.xlu0 %1372
        %v1374 = vmax.f32 %v1332, %v1333
        %1375 = vmax.xlane.f32.xlu0 %v1374
        %v1376 = vpop.xlane.xlu0 %1375
        %v1377 = vmax.f32 %v1334, %v1335
        %1378 = vmax.xlane.f32.xlu0 %v1377
        %v1379 = vpop.xlane.xlu0 %1378
        %v1380 = vmax.f32 %v1336, %v1337
        %1381 = vmax.xlane.f32.xlu0 %v1380
        %v1382 = vpop.xlane.xlu0 %1381
        %v1383 = vmax.f32 %v1338, %v1339
        %1384 = vmax.xlane.f32.xlu0 %v1383
        %v1385 = vpop.xlane.xlu0 %1384
        %v1386 = vmax.f32 %v1340, %v1341
        %1387 = vmax.xlane.f32.xlu0 %v1386
        %v1388 = vpop.xlane.xlu0 %1387
        %v1389 = vmax.f32 %v1342, %v1343
        %1390 = vmax.xlane.f32.xlu0 %v1389
        %v1391 = vpop.xlane.xlu0 %1390
        %v1392 = vld [vmem:[#allocation2] sm:$0xff]
        %v1393 = vld [vmem:[#allocation2 + $0x8] sm:$0xff]
        %v1394 = vld [vmem:[#allocation2 + $0x10] sm:$0xff]
        %v1395 = vld [vmem:[#allocation2 + $0x18] sm:$0xff]
        %v1396 = vld [vmem:[#allocation2 + $0x20] sm:$0xff]
        %v1397 = vld [vmem:[#allocation2 + $0x28] sm:$0xff]
        %v1398 = vld [vmem:[#allocation2 + $0x30] sm:$0xff]
        %v1399 = vld [vmem:[#allocation2 + $0x38] sm:$0xff]
        %v1400 = vld [vmem:[#allocation2 + $0x40] sm:$0xff]
        %v1401 = vld [vmem:[#allocation2 + $0x48] sm:$0xff]
        %v1402 = vld [vmem:[#allocation2 + $0x50] sm:$0xff]
        %v1403 = vld [vmem:[#allocation2 + $0x58] sm:$0xff]
        %v1404 = vld [vmem:[#allocation2 + $0x60] sm:$0xff]
        %v1405 = vld [vmem:[#allocation2 + $0x68] sm:$0xff]
        %v1406 = vld [vmem:[#allocation2 + $0x70] sm:$0xff]
        %v1407 = vld [vmem:[#allocation2 + $0x78] sm:$0xff]
        %vm1408 = vcmask 7168
        %v1409 = vsel %vm1408, %v695, %v788
        %v1410 = vsel %vm1408, %v698, %v791
        %v1411 = vsel %vm1408, %v701, %v794
        %v1412 = vsel %vm1408, %v704, %v797
        %v1413 = vsel %vm1408, %v707, %v800
        %v1414 = vsel %vm1408, %v710, %v803
        %v1415 = vsel %vm1408, %v713, %v806
        %v1416 = vsel %vm1408, %v716, %v809
        %v1417 = vsel %vm1408, %v719, %v812
        %v1418 = vsel %vm1408, %v722, %v815
        %v1419 = vsel %vm1408, %v725, %v818
        %v1420 = vsel %vm1408, %v728, %v821
        %v1421 = vsel %vm1408, %v731, %v824
        %v1422 = vsel %vm1408, %v734, %v827
        %v1423 = vsel %vm1408, %v737, %v830
        %v1424 = vsel %vm1408, %v740, %v833
        %vm1425 = vcmask 15360
        %v1426 = vsel %vm1425, %v1409, %v881
        %v1427 = vsel %vm1425, %v1410, %v884
        %v1428 = vsel %vm1425, %v1411, %v887
        %v1429 = vsel %vm1425, %v1412, %v890
        %v1430 = vsel %vm1425, %v1413, %v893
        %v1431 = vsel %vm1425, %v1414, %v896
        %v1432 = vsel %vm1425, %v1415, %v899
        %v1433 = vsel %vm1425, %v1416, %v902
        %v1434 = vsel %vm1425, %v1417, %v905
        %v1435 = vsel %vm1425, %v1418, %v908
        %v1436 = vsel %vm1425, %v1419, %v911
        %v1437 = vsel %vm1425, %v1420, %v914
        %v1438 = vsel %vm1425, %v1421, %v917
        %v1439 = vsel %vm1425, %v1422, %v920
        %v1440 = vsel %vm1425, %v1423, %v923
        %v1441 = vsel %vm1425, %v1424, %v926
        %vm1442 = vcmask 23552
        %v1443 = vsel %vm1442, %v1426, %v974
        %v1444 = vsel %vm1442, %v1427, %v977
        %v1445 = vsel %vm1442, %v1428, %v980
        %v1446 = vsel %vm1442, %v1429, %v983
        %v1447 = vsel %vm1442, %v1430, %v986
        %v1448 = vsel %vm1442, %v1431, %v989
        %v1449 = vsel %vm1442, %v1432, %v992
        %v1450 = vsel %vm1442, %v1433, %v995
        %v1451 = vsel %vm1442, %v1434, %v998
        %v1452 = vsel %vm1442, %v1435, %v1001
        %v1453 = vsel %vm1442, %v1436, %v1004
        %v1454 = vsel %vm1442, %v1437, %v1007
        %v1455 = vsel %vm1442, %v1438, %v1010
        %v1456 = vsel %vm1442, %v1439, %v1013
        %v1457 = vsel %vm1442, %v1440, %v1016
        %v1458 = vsel %vm1442, %v1441, %v1019
        %vm1459 = vcmask 31744
        %v1460 = vsel %vm1459, %v1443, %v1067
        %v1461 = vsel %vm1459, %v1444, %v1070
        %v1462 = vsel %vm1459, %v1445, %v1073
        %v1463 = vsel %vm1459, %v1446, %v1076
        %v1464 = vsel %vm1459, %v1447, %v1079
        %v1465 = vsel %vm1459, %v1448, %v1082
        %v1466 = vsel %vm1459, %v1449, %v1085
        %v1467 = vsel %vm1459, %v1450, %v1088
        %v1468 = vsel %vm1459, %v1451, %v1091
        %v1469 = vsel %vm1459, %v1452, %v1094
        %v1470 = vsel %vm1459, %v1453, %v1097
        %v1471 = vsel %vm1459, %v1454, %v1100
        %v1472 = vsel %vm1459, %v1455, %v1103
        %v1473 = vsel %vm1459, %v1456, %v1106
        %v1474 = vsel %vm1459, %v1457, %v1109
        %v1475 = vsel %vm1459, %v1458, %v1112
        %vm1476 = vcmask 39936
        %v1477 = vsel %vm1476, %v1460, %v1160
        %v1478 = vsel %vm1476, %v1461, %v1163
        %v1479 = vsel %vm1476, %v1462, %v1166
        %v1480 = vsel %vm1476, %v1463, %v1169
        %v1481 = vsel %vm1476, %v1464, %v1172
        %v1482 = vsel %vm1476, %v1465, %v1175
        %v1483 = vsel %vm1476, %v1466, %v1178
        %v1484 = vsel %vm1476, %v1467, %v1181
        %v1485 = vsel %vm1476, %v1468, %v1184
        %v1486 = vsel %vm1476, %v1469, %v1187
        %v1487 = vsel %vm1476, %v1470, %v1190
        %v1488 = vsel %vm1476, %v1471, %v1193
        %v1489 = vsel %vm1476, %v1472, %v1196
        %v1490 = vsel %vm1476, %v1473, %v1199
        %v1491 = vsel %vm1476, %v1474, %v1202
        %v1492 = vsel %vm1476, %v1475, %v1205
        %vm1493 = vcmask 48128
        %v1494 = vsel %vm1493, %v1477, %v1253
        %v1495 = vsel %vm1493, %v1478, %v1256
        %v1496 = vsel %vm1493, %v1479, %v1259
        %v1497 = vsel %vm1493, %v1480, %v1262
        %v1498 = vsel %vm1493, %v1481, %v1265
        %v1499 = vsel %vm1493, %v1482, %v1268
        %v1500 = vsel %vm1493, %v1483, %v1271
        %v1501 = vsel %vm1493, %v1484, %v1274
        %v1502 = vsel %vm1493, %v1485, %v1277
        %v1503 = vsel %vm1493, %v1486, %v1280
        %v1504 = vsel %vm1493, %v1487, %v1283
        %v1505 = vsel %vm1493, %v1488, %v1286
        %v1506 = vsel %vm1493, %v1489, %v1289
        %v1507 = vsel %vm1493, %v1490, %v1292
        %v1508 = vsel %vm1493, %v1491, %v1295
        %v1509 = vsel %vm1493, %v1492, %v1298
        %vm1510 = vcmask 56320
        %v1511 = vsel %vm1510, %v1494, %v1346
        %v1512 = vsel %vm1510, %v1495, %v1349
        %v1513 = vsel %vm1510, %v1496, %v1352
        %v1514 = vsel %vm1510, %v1497, %v1355
        %v1515 = vsel %vm1510, %v1498, %v1358
        %v1516 = vsel %vm1510, %v1499, %v1361
        %v1517 = vsel %vm1510, %v1500, %v1364
        %v1518 = vsel %vm1510, %v1501, %v1367
        %v1519 = vsel %vm1510, %v1502, %v1370
        %v1520 = vsel %vm1510, %v1503, %v1373
        %v1521 = vsel %vm1510, %v1504, %v1376
        %v1522 = vsel %vm1510, %v1505, %v1379
        %v1523 = vsel %vm1510, %v1506, %v1382
        %v1524 = vsel %vm1510, %v1507, %v1385
        %v1525 = vsel %vm1510, %v1508, %v1388
        %v1526 = vsel %vm1510, %v1509, %v1391
        %v1527 = vmax.f32 %v1392, %v1511
        %v1528 = vmax.f32 %v1393, %v1512
        %v1529 = vmax.f32 %v1394, %v1513
        %v1530 = vmax.f32 %v1395, %v1514
        %v1531 = vmax.f32 %v1396, %v1515
        %v1532 = vmax.f32 %v1397, %v1516
        %v1533 = vmax.f32 %v1398, %v1517
        %v1534 = vmax.f32 %v1399, %v1518
        %v1535 = vmax.f32 %v1400, %v1519
        %v1536 = vmax.f32 %v1401, %v1520
        %v1537 = vmax.f32 %v1402, %v1521
        %v1538 = vmax.f32 %v1403, %v1522
        %v1539 = vmax.f32 %v1404, %v1523
        %v1540 = vmax.f32 %v1405, %v1524
        %v1541 = vmax.f32 %v1406, %v1525
        %v1542 = vmax.f32 %v1407, %v1526
        %1543 = vst.msk [vmem:[#allocation2] sm:$0xff] %vm400, %v1527
        %1544 = vst.msk [vmem:[#allocation2 + $0x8] sm:$0xff] %vm400, %v1528
        %1545 = vst.msk [vmem:[#allocation2 + $0x10] sm:$0xff] %vm400, %v1529
        %1546 = vst.msk [vmem:[#allocation2 + $0x18] sm:$0xff] %vm400, %v1530
        %1547 = vst.msk [vmem:[#allocation2 + $0x20] sm:$0xff] %vm400, %v1531
        %1548 = vst.msk [vmem:[#allocation2 + $0x28] sm:$0xff] %vm400, %v1532
        %1549 = vst.msk [vmem:[#allocation2 + $0x30] sm:$0xff] %vm400, %v1533
        %1550 = vst.msk [vmem:[#allocation2 + $0x38] sm:$0xff] %vm400, %v1534
        %1551 = vst.msk [vmem:[#allocation2 + $0x40] sm:$0xff] %vm400, %v1535
        %1552 = vst.msk [vmem:[#allocation2 + $0x48] sm:$0xff] %vm400, %v1536
        %1553 = vst.msk [vmem:[#allocation2 + $0x50] sm:$0xff] %vm400, %v1537
        %1554 = vst.msk [vmem:[#allocation2 + $0x58] sm:$0xff] %vm400, %v1538
        %1555 = vst.msk [vmem:[#allocation2 + $0x60] sm:$0xff] %vm400, %v1539
        %1556 = vst.msk [vmem:[#allocation2 + $0x68] sm:$0xff] %vm400, %v1540
        %1557 = vst.msk [vmem:[#allocation2 + $0x70] sm:$0xff] %vm400, %v1541
        %1558 = vst.msk [vmem:[#allocation2 + $0x78] sm:$0xff] %vm400, %v1542
      $region48: #{tpu_custom_call.1} parent=39 // pred_fallthru
        _
      %s1559 = sld [smem:[#allocation6 + %s43]]
      %p1560 = scmp.eq.s32.totalorder %s1559, 1
      // Predicated region
      $region49: #{tpu_custom_call.1} parent=39 // pred_check
        %p1561 = pneg %p1560
      $region50: #{tpu_custom_call.1} parent=39 // pred_check_branch
        %1563 = sbr.rel (%p1561) target = $region52
      $region51: #{tpu_custom_call.1} parent=39 // pred_region
        %v1564 = vld [vmem:[#allocation2] sm:$0xff]
        %v1565 = vld [vmem:[#allocation2 + $0x8] sm:$0xff]
        %v1566 = vld [vmem:[#allocation2 + $0x10] sm:$0xff]
        %v1567 = vld [vmem:[#allocation2 + $0x18] sm:$0xff]
        %v1568 = vld [vmem:[#allocation2 + $0x20] sm:$0xff]
        %v1569 = vld [vmem:[#allocation2 + $0x28] sm:$0xff]
        %v1570 = vld [vmem:[#allocation2 + $0x30] sm:$0xff]
        %v1571 = vld [vmem:[#allocation2 + $0x38] sm:$0xff]
        %v1572 = vld [vmem:[#allocation2 + $0x40] sm:$0xff]
        %v1573 = vld [vmem:[#allocation2 + $0x48] sm:$0xff]
        %v1574 = vld [vmem:[#allocation2 + $0x50] sm:$0xff]
        %v1575 = vld [vmem:[#allocation2 + $0x58] sm:$0xff]
        %v1576 = vld [vmem:[#allocation2 + $0x60] sm:$0xff]
        %v1577 = vld [vmem:[#allocation2 + $0x68] sm:$0xff]
        %v1578 = vld [vmem:[#allocation2 + $0x70] sm:$0xff]
        %v1579 = vld [vmem:[#allocation2 + $0x78] sm:$0xff]
        %v1580 = vld [vmem:[%s8] sm:$0xff]
        %v1581 = vld [vmem:[%s8 + $0x8] sm:$0xff]
        %v1582 = vld [vmem:[%s8 + $0x10] sm:$0xff]
        %v1583 = vld [vmem:[%s8 + $0x18] sm:$0xff]
        %v1584 = vld [vmem:[%s8 + $0x20] sm:$0xff]
        %v1585 = vld [vmem:[%s8 + $0x28] sm:$0xff]
        %v1586 = vld [vmem:[%s8 + $0x30] sm:$0xff]
        %v1587 = vld [vmem:[%s8 + $0x38] sm:$0xff]
        %v1588 = vld [vmem:[%s8 + $0x40] sm:$0xff]
        %v1589 = vld [vmem:[%s8 + $0x48] sm:$0xff]
        %v1590 = vld [vmem:[%s8 + $0x50] sm:$0xff]
        %v1591 = vld [vmem:[%s8 + $0x58] sm:$0xff]
        %v1592 = vld [vmem:[%s8 + $0x60] sm:$0xff]
        %v1593 = vld [vmem:[%s8 + $0x68] sm:$0xff]
        %v1594 = vld [vmem:[%s8 + $0x70] sm:$0xff]
        %v1595 = vld [vmem:[%s8 + $0x78] sm:$0xff]
        %v1596 = vld [vmem:[%s9] sm:$0xff]
        %v1597 = vld [vmem:[%s9 + $0x8] sm:$0xff]
        %v1598 = vld [vmem:[%s9 + $0x10] sm:$0xff]
        %v1599 = vld [vmem:[%s9 + $0x18] sm:$0xff]
        %v1600 = vld [vmem:[%s9 + $0x20] sm:$0xff]
        %v1601 = vld [vmem:[%s9 + $0x28] sm:$0xff]
        %v1602 = vld [vmem:[%s9 + $0x30] sm:$0xff]
        %v1603 = vld [vmem:[%s9 + $0x38] sm:$0xff]
        %v1604 = vld [vmem:[%s9 + $0x40] sm:$0xff]
        %v1605 = vld [vmem:[%s9 + $0x48] sm:$0xff]
        %v1606 = vld [vmem:[%s9 + $0x50] sm:$0xff]
        %v1607 = vld [vmem:[%s9 + $0x58] sm:$0xff]
        %v1608 = vld [vmem:[%s9 + $0x60] sm:$0xff]
        %v1609 = vld [vmem:[%s9 + $0x68] sm:$0xff]
        %v1610 = vld [vmem:[%s9 + $0x70] sm:$0xff]
        %v1611 = vld [vmem:[%s9 + $0x78] sm:$0xff]
        %1613 = vset.pattern.permute.xlu0 0
        %1614 = vperm.xlu0 %1613, %v1596
        %v1615 = vpop.permute.xlu0 %1614
        %1618 = vset.pattern.permute.xlu0 0
        %1619 = vperm.xlu0 %1618, %v1597
        %v1620 = vpop.permute.xlu0 %1619
        %1623 = vset.pattern.permute.xlu0 0
        %1624 = vperm.xlu0 %1623, %v1598
        %v1625 = vpop.permute.xlu0 %1624
        %1628 = vset.pattern.permute.xlu0 0
        %1629 = vperm.xlu0 %1628, %v1599
        %v1630 = vpop.permute.xlu0 %1629
        %1633 = vset.pattern.permute.xlu0 0
        %1634 = vperm.xlu0 %1633, %v1600
        %v1635 = vpop.permute.xlu0 %1634
        %1638 = vset.pattern.permute.xlu0 0
        %1639 = vperm.xlu0 %1638, %v1601
        %v1640 = vpop.permute.xlu0 %1639
        %1643 = vset.pattern.permute.xlu0 0
        %1644 = vperm.xlu0 %1643, %v1602
        %v1645 = vpop.permute.xlu0 %1644
        %1648 = vset.pattern.permute.xlu0 0
        %1649 = vperm.xlu0 %1648, %v1603
        %v1650 = vpop.permute.xlu0 %1649
        %1653 = vset.pattern.permute.xlu0 0
        %1654 = vperm.xlu0 %1653, %v1604
        %v1655 = vpop.permute.xlu0 %1654
        %1658 = vset.pattern.permute.xlu0 0
        %1659 = vperm.xlu0 %1658, %v1605
        %v1660 = vpop.permute.xlu0 %1659
        %1663 = vset.pattern.permute.xlu0 0
        %1664 = vperm.xlu0 %1663, %v1606
        %v1665 = vpop.permute.xlu0 %1664
        %1668 = vset.pattern.permute.xlu0 0
        %1669 = vperm.xlu0 %1668, %v1607
        %v1670 = vpop.permute.xlu0 %1669
        %1673 = vset.pattern.permute.xlu0 0
        %1674 = vperm.xlu0 %1673, %v1608
        %v1675 = vpop.permute.xlu0 %1674
        %1678 = vset.pattern.permute.xlu0 0
        %1679 = vperm.xlu0 %1678, %v1609
        %v1680 = vpop.permute.xlu0 %1679
        %1683 = vset.pattern.permute.xlu0 0
        %1684 = vperm.xlu0 %1683, %v1610
        %v1685 = vpop.permute.xlu0 %1684
        %1688 = vset.pattern.permute.xlu0 0
        %1689 = vperm.xlu0 %1688, %v1611
        %v1690 = vpop.permute.xlu0 %1689
        %1692 = vmatprep.subr.mxu0 0.0
        %1693 = vmatpush1.msra.mxu0 %v1564
        %1694 = vmatprep.subr.mxu0 0.0
        %1695 = vmatpush1.msra.mxu0 %v1565
        %1696 = vmatprep.subr.mxu0 0.0
        %1697 = vmatpush1.msra.mxu0 %v1566
        %1698 = vmatprep.subr.mxu0 0.0
        %1699 = vmatpush1.msra.mxu0 %v1567
        %1700 = vmatprep.subr.mxu0 0.0
        %1701 = vmatpush1.msra.mxu0 %v1568
        %1702 = vmatprep.subr.mxu0 0.0
        %1703 = vmatpush1.msra.mxu0 %v1569
        %1704 = vmatprep.subr.mxu0 0.0
        %1705 = vmatpush1.msra.mxu0 %v1570
        %1706 = vmatprep.subr.mxu0 0.0
        %1707 = vmatpush1.msra.mxu0 %v1571
        %1708 = vmatprep.subr.mxu0 0.0
        %1709 = vmatpush1.msra.mxu0 %v1572
        %1710 = vmatprep.subr.mxu0 0.0
        %1711 = vmatpush1.msra.mxu0 %v1573
        %1712 = vmatprep.subr.mxu0 0.0
        %1713 = vmatpush1.msra.mxu0 %v1574
        %1714 = vmatprep.subr.mxu0 0.0
        %1715 = vmatpush1.msra.mxu0 %v1575
        %1716 = vmatprep.subr.mxu0 0.0
        %1717 = vmatpush1.msra.mxu0 %v1576
        %1718 = vmatprep.subr.mxu0 0.0
        %1719 = vmatpush1.msra.mxu0 %v1577
        %1720 = vmatprep.subr.mxu0 0.0
        %1721 = vmatpush1.msra.mxu0 %v1578
        %1722 = vmatprep.subr.mxu0 0.0
        %1723 = vmatpush1.msra.mxu0 %v1579
        %1724 = vmatprep.subr.mxu0 0.0
        %1725 = vmatpush1.msra.mxu0 0.0
        %1726 = vmatprep.subr.mxu0 0.0
        %1727 = vmatpush1.msra.mxu0 0.0
        %1728 = vmatprep.subr.mxu0 0.0
        %1729 = vmatpush1.msra.mxu0 0.0
        %1730 = vmatprep.subr.mxu0 0.0
        %1731 = vmatpush1.msra.mxu0 0.0
        %1732 = vmatprep.subr.mxu0 0.0
        %1733 = vmatpush1.msra.mxu0 0.0
        %1734 = vmatprep.subr.mxu0 0.0
        %1735 = vmatpush1.msra.mxu0 0.0
        %1736 = vmatprep.subr.mxu0 0.0
        %1737 = vmatpush1.msra.mxu0 0.0
        %1738 = vmatprep.subr.mxu0 0.0
        %1739 = vmatpush1.msra.mxu0 0.0
        %1740 = vmatprep.subr.mxu0 0.0
        %1741 = vmatpush1.msra.mxu0 0.0
        %1742 = vmatprep.subr.mxu0 0.0
        %1743 = vmatpush1.msra.mxu0 0.0
        %1744 = vmatprep.subr.mxu0 0.0
        %1745 = vmatpush1.msra.mxu0 0.0
        %1746 = vmatprep.subr.mxu0 0.0
        %1747 = vmatpush1.msra.mxu0 0.0
        %1748 = vmatprep.subr.mxu0 0.0
        %1749 = vmatpush1.msra.mxu0 0.0
        %1750 = vmatprep.subr.mxu0 0.0
        %1751 = vmatpush1.msra.mxu0 0.0
        %1752 = vmatprep.subr.mxu0 0.0
        %1753 = vmatpush1.msra.mxu0 0.0
        %1754 = vmatprep.subr.mxu0 0.0
        %1755 = vmatpush1.msra.mxu0 0.0
        %1756 = vmatprep.mubr.f32.mxu0 0.0
        %1757 = vmatmul.mubr.f32.gmra.mrb[0].mxu0 %v1580
        %v1758 = vpop.f32.mrb[0].mxu0
        %v1759 = vadd.f32 %v1615, %v1758
        %v1760 = vpop.f32.mrb[0].mxu0
        %1761 = vmatprep.mubr.f32.mxu0 0.0
        %1762 = vmatmul.mubr.f32.gmra.mrb[0].mxu0 %v1581
        %v1763 = vpop.f32.mrb[0].mxu0
        %v1764 = vadd.f32 %v1620, %v1763
        %v1765 = vpop.f32.mrb[0].mxu0
        %1766 = vmatprep.mubr.f32.mxu0 0.0
        %1767 = vmatmul.mubr.f32.gmra.mrb[0].mxu0 %v1582
        %v1768 = vpop.f32.mrb[0].mxu0
        %v1769 = vadd.f32 %v1625, %v1768
        %v1770 = vpop.f32.mrb[0].mxu0
        %1771 = vmatprep.mubr.f32.mxu0 0.0
        %1772 = vmatmul.mubr.f32.gmra.mrb[0].mxu0 %v1583
        %v1773 = vpop.f32.mrb[0].mxu0
        %v1774 = vadd.f32 %v1630, %v1773
        %v1775 = vpop.f32.mrb[0].mxu0
        %1776 = vmatprep.mubr.f32.mxu0 0.0
        %1777 = vmatmul.mubr.f32.gmra.mrb[0].mxu0 %v1584
        %v1778 = vpop.f32.mrb[0].mxu0
        %v1779 = vadd.f32 %v1635, %v1778
        %v1780 = vpop.f32.mrb[0].mxu0
        %1781 = vmatprep.mubr.f32.mxu0 0.0
        %1782 = vmatmul.mubr.f32.gmra.mrb[0].mxu0 %v1585
        %v1783 = vpop.f32.mrb[0].mxu0
        %v1784 = vadd.f32 %v1640, %v1783
        %v1785 = vpop.f32.mrb[0].mxu0
        %1786 = vmatprep.mubr.f32.mxu0 0.0
        %1787 = vmatmul.mubr.f32.gmra.mrb[0].mxu0 %v1586
        %v1788 = vpop.f32.mrb[0].mxu0
        %v1789 = vadd.f32 %v1645, %v1788
        %v1790 = vpop.f32.mrb[0].mxu0
        %1791 = vmatprep.mubr.f32.mxu0 0.0
        %1792 = vmatmul.mubr.f32.gmra.mrb[0].mxu0 %v1587
        %v1793 = vpop.f32.mrb[0].mxu0
        %v1794 = vadd.f32 %v1650, %v1793
        %v1795 = vpop.f32.mrb[0].mxu0
        %1796 = vmatprep.mubr.f32.mxu0 0.0
        %1797 = vmatmul.mubr.f32.gmra.mrb[0].mxu0 %v1588
        %v1798 = vpop.f32.mrb[0].mxu0
        %v1799 = vadd.f32 %v1655, %v1798
        %v1800 = vpop.f32.mrb[0].mxu0
        %1801 = vmatprep.mubr.f32.mxu0 0.0
        %1802 = vmatmul.mubr.f32.gmra.mrb[0].mxu0 %v1589
        %v1803 = vpop.f32.mrb[0].mxu0
        %v1804 = vadd.f32 %v1660, %v1803
        %v1805 = vpop.f32.mrb[0].mxu0
        %1806 = vmatprep.mubr.f32.mxu0 0.0
        %1807 = vmatmul.mubr.f32.gmra.mrb[0].mxu0 %v1590
        %v1808 = vpop.f32.mrb[0].mxu0
        %v1809 = vadd.f32 %v1665, %v1808
        %v1810 = vpop.f32.mrb[0].mxu0
        %1811 = vmatprep.mubr.f32.mxu0 0.0
        %1812 = vmatmul.mubr.f32.gmra.mrb[0].mxu0 %v1591
        %v1813 = vpop.f32.mrb[0].mxu0
        %v1814 = vadd.f32 %v1670, %v1813
        %v1815 = vpop.f32.mrb[0].mxu0
        %1816 = vmatprep.mubr.f32.mxu0 0.0
        %1817 = vmatmul.mubr.f32.gmra.mrb[0].mxu0 %v1592
        %v1818 = vpop.f32.mrb[0].mxu0
        %v1819 = vadd.f32 %v1675, %v1818
        %v1820 = vpop.f32.mrb[0].mxu0
        %1821 = vmatprep.mubr.f32.mxu0 0.0
        %1822 = vmatmul.mubr.f32.gmra.mrb[0].mxu0 %v1593
        %v1823 = vpop.f32.mrb[0].mxu0
        %v1824 = vadd.f32 %v1680, %v1823
        %v1825 = vpop.f32.mrb[0].mxu0
        %1826 = vmatprep.mubr.f32.mxu0 0.0
        %1827 = vmatmul.mubr.f32.gmra.mrb[0].mxu0 %v1594
        %v1828 = vpop.f32.mrb[0].mxu0
        %v1829 = vadd.f32 %v1685, %v1828
        %v1830 = vpop.f32.mrb[0].mxu0
        %1831 = vmatprep.mubr.f32.mxu0 0.0
        %1832 = vmatmul.mubr.f32.gmra.mrb[0].mxu0 %v1595
        %v1833 = vpop.f32.mrb[0].mxu0
        %v1834 = vadd.f32 %v1690, %v1833
        %v1835 = vpop.f32.mrb[0].mxu0
        %1836 = vdwg.mxu0
        %v1837 = vmax.f32 %v1759, 0.0
        %v1838 = vmax.f32 %v1764, 0.0
        %v1839 = vmax.f32 %v1769, 0.0
        %v1840 = vmax.f32 %v1774, 0.0
        %v1841 = vmax.f32 %v1779, 0.0
        %v1842 = vmax.f32 %v1784, 0.0
        %v1843 = vmax.f32 %v1789, 0.0
        %v1844 = vmax.f32 %v1794, 0.0
        %v1845 = vmax.f32 %v1799, 0.0
        %v1846 = vmax.f32 %v1804, 0.0
        %v1847 = vmax.f32 %v1809, 0.0
        %v1848 = vmax.f32 %v1814, 0.0
        %v1849 = vmax.f32 %v1819, 0.0
        %v1850 = vmax.f32 %v1824, 0.0
        %v1851 = vmax.f32 %v1829, 0.0
        %v1852 = vmax.f32 %v1834, 0.0
        %vm1853 = vcmask 64512
        %1854 = vst.msk [vmem:[%s257] sm:$0xff] %vm1853, %v1837
        %1855 = vst.msk [vmem:[%s257 + $0x8] sm:$0xff] %vm1853, %v1838
        %1856 = vst.msk [vmem:[%s257 + $0x10] sm:$0xff] %vm1853, %v1839
        %1857 = vst.msk [vmem:[%s257 + $0x18] sm:$0xff] %vm1853, %v1840
        %1858 = vst.msk [vmem:[%s257 + $0x20] sm:$0xff] %vm1853, %v1841
        %1859 = vst.msk [vmem:[%s257 + $0x28] sm:$0xff] %vm1853, %v1842
        %1860 = vst.msk [vmem:[%s257 + $0x30] sm:$0xff] %vm1853, %v1843
        %1861 = vst.msk [vmem:[%s257 + $0x38] sm:$0xff] %vm1853, %v1844
        %1862 = vst.msk [vmem:[%s257 + $0x40] sm:$0xff] %vm1853, %v1845
        %1863 = vst.msk [vmem:[%s257 + $0x48] sm:$0xff] %vm1853, %v1846
        %1864 = vst.msk [vmem:[%s257 + $0x50] sm:$0xff] %vm1853, %v1847
        %1865 = vst.msk [vmem:[%s257 + $0x58] sm:$0xff] %vm1853, %v1848
        %1866 = vst.msk [vmem:[%s257 + $0x60] sm:$0xff] %vm1853, %v1849
        %1867 = vst.msk [vmem:[%s257 + $0x68] sm:$0xff] %vm1853, %v1850
        %1868 = vst.msk [vmem:[%s257 + $0x70] sm:$0xff] %vm1853, %v1851
        %1869 = vst.msk [vmem:[%s257 + $0x78] sm:$0xff] %vm1853, %v1852
      $region52: #{tpu_custom_call.1} parent=39 // pred_fallthru
        _
      %s1870 = sld [smem:[#allocation4 + %s43]]
      %p1871 = scmp.lt.s32.totalorder %s1870, 3
      %s1872 = scalar_select %p1871, %s1870, 3
      %s1873 = smul.addr %s1872, 16
      %s1874 = smul.addr %s1873, 8
      %s1875 = scalar_lea.vmem %s10, %s1874
      // Predicated region
      $region53: #{tpu_custom_call.1} parent=39 // pred_check
        %p1876 = pneg %p173
      $region54: #{tpu_custom_call.1} parent=39 // pred_check_branch
        %1878 = sbr.rel (%p1876) target = $region56
      $region55: #{tpu_custom_call.1} parent=39 // pred_region
        %s1879 = sld [smem:[#allocation4 + %s43]]
      $region56: #{tpu_custom_call.1} parent=39 // pred_fallthru
        _
    $region40: #{tpu_custom_call.1} parent=5 // pred_fallthru
      _
    %p1880 = scmp.le.s32.totalorder 2, %s38
    // Predicated region
    $region57: #{tpu_custom_call.1} parent=5 // pred_check
      %p1881 = pneg %p1880
    $region58: #{tpu_custom_call.1} parent=5 // pred_check_branch
      %1883 = sbr.rel (%p1881) target = $region60
    $region59: #{tpu_custom_call.1} parent=5 // pred_region
      %s1884 = ssub.s32 %s38, 2
      // Predicated region
      $region61: #{tpu_custom_call.1} parent=59 // pred_check
        %p1885 = pneg %p179
      $region62: #{tpu_custom_call.1} parent=59 // pred_check_branch
        %1887 = sbr.rel (%p1885) target = $region64
      $region63: #{tpu_custom_call.1} parent=59 // pred_region
        %s1888 = sld [smem:[#allocation4 + %s44]]
        %p1889 = scmp.lt.s32.totalorder %s1888, 3
        %s1890 = scalar_select %p1889, %s1888, 3
        %s1891 = smul.addr %s1890, 16
        %s1892 = smul.addr %s1891, 8
        %s1893 = scalar_lea.vmem %s10, %s1892
      $region64: #{tpu_custom_call.1} parent=59 // pred_fallthru
        _
    $region60: #{tpu_custom_call.1} parent=5 // pred_fallthru
      _
  $region6: #{tpu_custom_call.1} parent=0 // loop_footer
    %s42 = sadd.s32 1, %s38
  $region7: #{tpu_custom_call.1} parent=0 // loop_footer_branch
    %37 = sbr.rel target = $region3
  $region8: #{tpu_custom_call.1} parent=0 // loop_exit
    _

</llo_original>
